<compile_context>
chip_gen: v7x
topology: tpu7x:2x2x1
jax: 0.10.0
libtpu: 0.0.40
codegen_flags: <defaults>
</compile_context>

<pallas_src>
import jax
import jax.numpy as jnp
from jax.experimental import pallas as pl
from jax.experimental.pallas import tpu as pltpu


# ------------------------------ Pallas kernels ------------------------------


def _actor_decode_kernel(x_ref, w1, b1, w2, b2, w3m, b3m, wd1, bd1, wd2, bd2,
                         o_ref):
    """Fused actor MLP -> tanh(mu) -> action_decoder MLP -> tanh.

    x_ref: (bm, latent_state_dim) f32 (cast to bf16 in-kernel).
    Weights bf16, biases f32.  w3m/b3m are the mu half of the third linear at
    their true latent_action_dim width; wd2/bd2 are zero-padded to 128 output
    lanes for dense stores.
    """
    x = x_ref[...].astype(jnp.bfloat16)
    h = jnp.maximum(
        jnp.dot(x, w1[...], preferred_element_type=jnp.float32) + b1[...],
        0.0).astype(jnp.bfloat16)
    h = jnp.maximum(
        jnp.dot(h, w2[...], preferred_element_type=jnp.float32) + b2[...],
        0.0).astype(jnp.bfloat16)
    mu = jnp.dot(h, w3m[...], preferred_element_type=jnp.float32) + b3m[...]
    latent_action = jnp.tanh(mu).astype(jnp.bfloat16)        # (bm, A) narrow
    d = jnp.maximum(
        jnp.dot(latent_action, wd1[...],
                preferred_element_type=jnp.float32) + bd1[...],
        0.0).astype(jnp.bfloat16)
    o_ref[...] = jnp.tanh(
        jnp.dot(d, wd2[...], preferred_element_type=jnp.float32) + bd2[...])


def _decode_only_kernel(la_ref, wd1, bd1, wd2, bd2, o_ref):
    """Path where the embedding is already a latent action (true K=8 width)."""
    la = la_ref[...].astype(jnp.bfloat16)
    d = jnp.maximum(
        jnp.dot(la, wd1[...], preferred_element_type=jnp.float32) + bd1[...],
        0.0).astype(jnp.bfloat16)
    o_ref[...] = jnp.tanh(
        jnp.dot(d, wd2[...], preferred_element_type=jnp.float32) + bd2[...])


# ------------------------------ wrapper / glue -------------------------------


def _round_up(x, m):
    return ((x + m - 1) // m) * m


def _pick_bm(batch):
    """Batch tile choice.

    <= 1024 rows: one full tile (per-step overhead dominates this tiny kernel;
    weights are resident so there is nothing to pipeline against).
    Larger: tiles that are multiples of 256 so the MXU M dimension is full on
    v6e/v7x and the "parallel" batch axis can put one big tile per TensorCore
    on v7x; capped at 2048 rows to stay well under v7x's 64 MiB VMEM.
    """
    if batch <= 1024:
        return batch
    return min(_round_up(pl.cdiv(batch, 2), 256), 2048)


def _full_spec(shape):
    # Whole-array block; constant block index -> resident, not re-DMA'd per step.
    ndim = len(shape)
    return pl.BlockSpec(shape, lambda i, _n=ndim: (0,) * _n)


def pack_params(params, *, latent_action_dim, concrete_action_dim):
    """Cast weights to bf16, drop the sigma half of W3, and zero-pad only the
    concrete-action output lanes to 128 (dense output stores)."""
    c_pad = _round_up(concrete_action_dim, 128)

    wd2 = jnp.pad(params["wd2"], ((0, 0), (0, c_pad - concrete_action_dim)))
    bd2 = jnp.pad(params["bd2"], ((0, 0), (0, c_pad - concrete_action_dim)))

    bf16 = jnp.bfloat16
    return dict(
        w1=params["w1"].astype(bf16), b1=params["b1"].astype(jnp.float32),
        w2=params["w2"].astype(bf16), b2=params["b2"].astype(jnp.float32),
        w3m=params["w3"][:, :latent_action_dim].astype(bf16),
        b3m=params["b3"][:, :latent_action_dim].astype(jnp.float32),
        wd1=params["wd1"].astype(bf16), bd1=params["bd1"].astype(jnp.float32),
        wd2=wd2.astype(bf16), bd2=bd2.astype(jnp.float32),
    )


def action_tower_forward(embedding, packed, *, latent_state_dim,
                         latent_action_dim, concrete_action_dim, bm=None):
    batch, emb_dim = embedding.shape
    c_pad = packed["wd2"].shape[1]          # padded concrete_action_dim (128)

    if bm is None:
        bm = _pick_bm(batch)
    bm = min(bm, batch)
    grid = (pl.cdiv(batch, bm),)            # ragged final block handled by Pallas

    out_shape = jax.ShapeDtypeStruct((batch, c_pad), jnp.float32)
    out_spec = pl.BlockSpec((bm, c_pad), lambda i: (i, 0))
    compiler_params = pltpu.CompilerParams(
        dimension_semantics=("parallel",),
        vmem_limit_bytes=32 * 1024 * 1024)   # safe under v7x's 64 MiB physical VMEM

    if emb_dim == latent_action_dim:
        # Decoder-only path: raw (batch, latent_action_dim) input, no padding.
        ordered = [packed[k] for k in ("wd1", "bd1", "wd2", "bd2")]
        in_specs = [pl.BlockSpec((bm, emb_dim), lambda i: (i, 0))]
        in_specs += [_full_spec(p.shape) for p in ordered]
        out = pl.pallas_call(
            _decode_only_kernel,
            out_shape=out_shape,
            grid=grid,
            in_specs=in_specs,
            out_specs=out_spec,
            compiler_params=compiler_params,
        )(embedding, *ordered)
    elif emb_dim == latent_state_dim:
        ordered = [packed[k] for k in ("w1", "b1", "w2", "b2", "w3m", "b3m",
                                       "wd1", "bd1", "wd2", "bd2")]
        in_specs = [pl.BlockSpec((bm, emb_dim), lambda i: (i, 0))]
        in_specs += [_full_spec(p.shape) for p in ordered]
        out = pl.pallas_call(
            _actor_decode_kernel,
            out_shape=out_shape,
            grid=grid,
            in_specs=in_specs,
            out_specs=out_spec,
            compiler_params=compiler_params,
        )(embedding, *ordered)
    else:
        raise ValueError(
            f"Unsupported embedding dimension {emb_dim} for ActionTower.forward")

    return out[:, :concrete_action_dim]


# ------------------------------ parameter init -------------------------------


def init_params(key, latent_state_dim, latent_action_dim, concrete_action_dim):
    hidden = 512
    dec_hidden = 256

    def linear(key, fan_in, fan_out):
        kw, kb = jax.random.split(key)
        bound = 1.0 / jnp.sqrt(fan_in)
        w = jax.random.uniform(kw, (fan_in, fan_out), jnp.float32, -bound, bound)
        b = jax.random.uniform(kb, (1, fan_out), jnp.float32, -bound, bound)
        return w, b

    keys = jax.random.split(key, 5)
    w1, b1 = linear(keys[0], latent_state_dim, hidden)
    w2, b2 = linear(keys[1], hidden, hidden)
    w3, b3 = linear(keys[2], hidden, 2 * latent_action_dim)
    wd1, bd1 = linear(keys[3], latent_action_dim, dec_hidden)
    wd2, bd2 = linear(keys[4], dec_hidden, concrete_action_dim)
    return dict(w1=w1, b1=b1, w2=w2, b2=b2, w3=w3, b3=b3,
                wd1=wd1, bd1=bd1, wd2=wd2, bd2=bd2)


# -------------------------------- references ---------------------------------


def reference_forward(embedding, params, *, latent_state_dim, latent_action_dim,
                      matmul_dtype=None):
    """Pure-JAX reference.  matmul_dtype=bf16 mirrors the kernel's mixed
    precision (bf16 operands, f32 accumulation); None keeps full f32."""
    def mm(x, w):
        if matmul_dtype is not None:
            x = x.astype(matmul_dtype)
            w = w.astype(matmul_dtype)
        return jnp.dot(x, w, preferred_element_type=jnp.float32)

    if embedding.shape[-1] == latent_action_dim:
        latent_action = embedding
    else:
        h = jnp.maximum(mm(embedding, params["w1"]) + params["b1"], 0.0)
        h = jnp.maximum(mm(h, params["w2"]) + params["b2"], 0.0)
        mu = (mm(h, params["w3"]) + params["b3"])[:, :latent_action_dim]
        latent_action = jnp.tanh(mu)
    d = jnp.maximum(mm(latent_action, params["wd1"]) + params["bd1"], 0.0)
    return jnp.tanh(mm(d, params["wd2"]) + params["bd2"])


# ----------------------------------- main ------------------------------------

if __name__ == "__main__":
    latent_state_dim = 32
    latent_action_dim = 8
    concrete_action_dim = 4
    batch_state = 64     # single full tile (grid=(1,))
    batch_action = 6     # tiny batch, full-dim block (not a multiple of 8)
    batch_ragged = 72    # with bm=32 -> grid=(3,), ragged (masked) last block

    key = jax.random.PRNGKey(0)
    k_params, k_state, k_act = jax.random.split(key, 3)
    params = init_params(k_params, latent_state_dim, latent_action_dim,
                         concrete_action_dim)
    packed = pack_params(params, latent_action_dim=latent_action_dim,
                         concrete_action_dim=concrete_action_dim)

    # Path 1: embedding is a latent *state* -> actor network + decoder.
    latent_state = jax.random.normal(k_state, (batch_state, latent_state_dim),
                                     jnp.float32)
    out_state = action_tower_forward(
        latent_state, packed,
        latent_state_dim=latent_state_dim,
        latent_action_dim=latent_action_dim,
        concrete_action_dim=concrete_action_dim)
    out_state = jax.block_until_ready(out_state)

    # Path 2: embedding is already a latent *action* -> decoder only.
    latent_action = jax.random.normal(k_act, (batch_action, latent_action_dim),
                                      jnp.float32)
    out_action = action_tower_forward(
        latent_action, packed,
        latent_state_dim=latent_state_dim,
        latent_action_dim=latent_action_dim,
        concrete_action_dim=concrete_action_dim)
    out_action = jax.block_until_ready(out_action)

    # Path 3: actor path again with an explicit tile that leaves a ragged
    # final grid block (exercises the no-batch-pad / masked-edge path).
    latent_state_r = jax.random.normal(k_state, (batch_ragged, latent_state_dim),
                                       jnp.float32)
    out_ragged = action_tower_forward(
        latent_state_r, packed,
        latent_state_dim=latent_state_dim,
        latent_action_dim=latent_action_dim,
        concrete_action_dim=concrete_action_dim,
        bm=32)
    out_ragged = jax.block_until_ready(out_ragged)

    assert out_state.shape == (batch_state, concrete_action_dim)
    assert out_action.shape == (batch_action, concrete_action_dim)
    assert out_ragged.shape == (batch_ragged, concrete_action_dim)

    # Tight check against a mixed-precision (bf16 operands, f32 acc) reference.
    ref_state_bf16 = reference_forward(
        latent_state, params, latent_state_dim=latent_state_dim,
        latent_action_dim=latent_action_dim, matmul_dtype=jnp.bfloat16)
    ref_action_bf16 = reference_forward(
        latent_action, params, latent_state_dim=latent_state_dim,
        latent_action_dim=latent_action_dim, matmul_dtype=jnp.bfloat16)
    ref_ragged_bf16 = reference_forward(
        latent_state_r, params, latent_state_dim=latent_state_dim,
        latent_action_dim=latent_action_dim, matmul_dtype=jnp.bfloat16)
    assert jnp.allclose(out_state, ref_state_bf16, atol=5e-3, rtol=5e-3)
    assert jnp.allclose(out_action, ref_action_bf16, atol=5e-3, rtol=5e-3)
    assert jnp.allclose(out_ragged, ref_ragged_bf16, atol=5e-3, rtol=5e-3)

    # Loose sanity check against the full-f32 reference (bf16 matmul error).
    ref_state_f32 = reference_forward(
        latent_state, params, latent_state_dim=latent_state_dim,
        latent_action_dim=latent_action_dim)
    ref_action_f32 = reference_forward(
        latent_action, params, latent_state_dim=latent_state_dim,
        latent_action_dim=latent_action_dim)
    ref_ragged_f32 = reference_forward(
        latent_state_r, params, latent_state_dim=latent_state_dim,
        latent_action_dim=latent_action_dim)
    assert jnp.allclose(out_state, ref_state_f32, atol=5e-2, rtol=5e-2)
    assert jnp.allclose(out_action, ref_action_f32, atol=5e-2, rtol=5e-2)
    assert jnp.allclose(out_ragged, ref_ragged_f32, atol=5e-2, rtol=5e-2)

    print("KERNEL_OK")
</pallas_src>

<mosaic_0001>
module attributes {stable_mosaic.version = 11 : i64} {
  func.func @_actor_decode_kernel(%arg0: i32, %arg1: memref<64x32xf32, #tpu.memory_space<vmem>>, %arg2: memref<32x512xbf16, #tpu.memory_space<vmem>>, %arg3: memref<1x512xf32, #tpu.memory_space<vmem>>, %arg4: memref<512x512xbf16, #tpu.memory_space<vmem>>, %arg5: memref<1x512xf32, #tpu.memory_space<vmem>>, %arg6: memref<512x8xbf16, #tpu.memory_space<vmem>>, %arg7: memref<1x8xf32, #tpu.memory_space<vmem>>, %arg8: memref<8x256xbf16, #tpu.memory_space<vmem>>, %arg9: memref<1x256xf32, #tpu.memory_space<vmem>>, %arg10: memref<256x128xbf16, #tpu.memory_space<vmem>>, %arg11: memref<1x128xf32, #tpu.memory_space<vmem>>, %arg12: memref<64x128xf32, #tpu.memory_space<vmem>>) attributes {dimension_semantics = [#tpu.dimension_semantics<parallel>], iteration_bounds = array<i64: 1>, scalar_prefetch = 0 : i64, scratch_operands = 0 : i64, tpu.core_type = #tpu.core_type<tc>, window_params = [{transform_indices = @transform_0, window_bounds = array<i64: 64, 32>}, {pipeline_mode = #tpu.pipeline_mode<synchronous>, transform_indices = @transform_1, window_bounds = array<i64: 32, 512>}, {pipeline_mode = #tpu.pipeline_mode<synchronous>, transform_indices = @transform_2, window_bounds = array<i64: 1, 512>}, {pipeline_mode = #tpu.pipeline_mode<synchronous>, transform_indices = @transform_3, window_bounds = array<i64: 512, 512>}, {pipeline_mode = #tpu.pipeline_mode<synchronous>, transform_indices = @transform_4, window_bounds = array<i64: 1, 512>}, {pipeline_mode = #tpu.pipeline_mode<synchronous>, transform_indices = @transform_5, window_bounds = array<i64: 512, 8>}, {pipeline_mode = #tpu.pipeline_mode<synchronous>, transform_indices = @transform_6, window_bounds = array<i64: 1, 8>}, {pipeline_mode = #tpu.pipeline_mode<synchronous>, transform_indices = @transform_7, window_bounds = array<i64: 8, 256>}, {pipeline_mode = #tpu.pipeline_mode<synchronous>, transform_indices = @transform_8, window_bounds = array<i64: 1, 256>}, {pipeline_mode = #tpu.pipeline_mode<synchronous>, transform_indices = @transform_9, window_bounds = array<i64: 256, 128>}, {pipeline_mode = #tpu.pipeline_mode<synchronous>, transform_indices = @transform_10, window_bounds = array<i64: 1, 128>}, {transform_indices = @transform_11, window_bounds = array<i64: 64, 128>}]} {
    %c0 = arith.constant 0 : index
    %c0_0 = arith.constant 0 : index
    %0 = vector.load %arg1[%c0, %c0_0] : memref<64x32xf32, #tpu.memory_space<vmem>>, vector<64x32xf32>
    %1 = arith.truncf %0 : vector<64x32xf32> to vector<64x32xbf16>
    %c0_1 = arith.constant 0 : index
    %c0_2 = arith.constant 0 : index
    %2 = vector.load %arg2[%c0_1, %c0_2] : memref<32x512xbf16, #tpu.memory_space<vmem>>, vector<32x512xbf16>
    %cst = arith.constant dense<0.000000e+00> : vector<64x512xf32>
    %3 = tpu.matmul %1, %2, %cst {dimension_numbers = #tpu.dot_dimension_numbers<[1], [0], [0], [1], [0, 0, 1, 1], [], []>} : vector<64x32xbf16>, vector<32x512xbf16>, vector<64x512xf32> -> vector<64x512xf32>
    %c0_3 = arith.constant 0 : index
    %c0_4 = arith.constant 0 : index
    %4 = vector.load %arg3[%c0_3, %c0_4] : memref<1x512xf32, #tpu.memory_space<vmem>>, vector<1x512xf32>
    %5 = vector.broadcast %4 : vector<1x512xf32> to vector<64x512xf32>
    %6 = arith.addf %3, %5 : vector<64x512xf32>
    %cst_5 = arith.constant 0.000000e+00 : f32
    %7 = vector.broadcast %cst_5 : f32 to vector<64x512xf32>
    %8 = arith.maximumf %6, %7 : vector<64x512xf32>
    %9 = arith.truncf %8 : vector<64x512xf32> to vector<64x512xbf16>
    %c0_6 = arith.constant 0 : index
    %c0_7 = arith.constant 0 : index
    %10 = vector.load %arg4[%c0_6, %c0_7] : memref<512x512xbf16, #tpu.memory_space<vmem>>, vector<512x512xbf16>
    %cst_8 = arith.constant dense<0.000000e+00> : vector<64x512xf32>
    %11 = tpu.matmul %9, %10, %cst_8 {dimension_numbers = #tpu.dot_dimension_numbers<[1], [0], [0], [1], [0, 0, 1, 1], [], []>} : vector<64x512xbf16>, vector<512x512xbf16>, vector<64x512xf32> -> vector<64x512xf32>
    %c0_9 = arith.constant 0 : index
    %c0_10 = arith.constant 0 : index
    %12 = vector.load %arg5[%c0_9, %c0_10] : memref<1x512xf32, #tpu.memory_space<vmem>>, vector<1x512xf32>
    %13 = vector.broadcast %12 : vector<1x512xf32> to vector<64x512xf32>
    %14 = arith.addf %11, %13 : vector<64x512xf32>
    %cst_11 = arith.constant 0.000000e+00 : f32
    %15 = vector.broadcast %cst_11 : f32 to vector<64x512xf32>
    %16 = arith.maximumf %14, %15 : vector<64x512xf32>
    %17 = arith.truncf %16 : vector<64x512xf32> to vector<64x512xbf16>
    %c0_12 = arith.constant 0 : index
    %c0_13 = arith.constant 0 : index
    %18 = vector.load %arg6[%c0_12, %c0_13] : memref<512x8xbf16, #tpu.memory_space<vmem>>, vector<512x8xbf16>
    %cst_14 = arith.constant dense<0.000000e+00> : vector<64x8xf32>
    %19 = tpu.matmul %17, %18, %cst_14 {dimension_numbers = #tpu.dot_dimension_numbers<[1], [0], [0], [1], [0, 0, 1, 1], [], []>} : vector<64x512xbf16>, vector<512x8xbf16>, vector<64x8xf32> -> vector<64x8xf32>
    %c0_15 = arith.constant 0 : index
    %c0_16 = arith.constant 0 : index
    %20 = vector.load %arg7[%c0_15, %c0_16] : memref<1x8xf32, #tpu.memory_space<vmem>>, vector<1x8xf32>
    %21 = vector.broadcast %20 : vector<1x8xf32> to vector<64x8xf32>
    %22 = arith.addf %19, %21 : vector<64x8xf32>
    %23 = math.tanh %22 : vector<64x8xf32>
    %24 = arith.truncf %23 : vector<64x8xf32> to vector<64x8xbf16>
    %c0_17 = arith.constant 0 : index
    %c0_18 = arith.constant 0 : index
    %25 = vector.load %arg8[%c0_17, %c0_18] : memref<8x256xbf16, #tpu.memory_space<vmem>>, vector<8x256xbf16>
    %cst_19 = arith.constant dense<0.000000e+00> : vector<64x256xf32>
    %26 = tpu.matmul %24, %25, %cst_19 {dimension_numbers = #tpu.dot_dimension_numbers<[1], [0], [0], [1], [0, 0, 1, 1], [], []>} : vector<64x8xbf16>, vector<8x256xbf16>, vector<64x256xf32> -> vector<64x256xf32>
    %c0_20 = arith.constant 0 : index
    %c0_21 = arith.constant 0 : index
    %27 = vector.load %arg9[%c0_20, %c0_21] : memref<1x256xf32, #tpu.memory_space<vmem>>, vector<1x256xf32>
    %28 = vector.broadcast %27 : vector<1x256xf32> to vector<64x256xf32>
    %29 = arith.addf %26, %28 : vector<64x256xf32>
    %cst_22 = arith.constant 0.000000e+00 : f32
    %30 = vector.broadcast %cst_22 : f32 to vector<64x256xf32>
    %31 = arith.maximumf %29, %30 : vector<64x256xf32>
    %32 = arith.truncf %31 : vector<64x256xf32> to vector<64x256xbf16>
    %c0_23 = arith.constant 0 : index
    %c0_24 = arith.constant 0 : index
    %33 = vector.load %arg10[%c0_23, %c0_24] : memref<256x128xbf16, #tpu.memory_space<vmem>>, vector<256x128xbf16>
    %cst_25 = arith.constant dense<0.000000e+00> : vector<64x128xf32>
    %34 = tpu.matmul %32, %33, %cst_25 {dimension_numbers = #tpu.dot_dimension_numbers<[1], [0], [0], [1], [0, 0, 1, 1], [], []>} : vector<64x256xbf16>, vector<256x128xbf16>, vector<64x128xf32> -> vector<64x128xf32>
    %c0_26 = arith.constant 0 : index
    %c0_27 = arith.constant 0 : index
    %35 = vector.load %arg11[%c0_26, %c0_27] : memref<1x128xf32, #tpu.memory_space<vmem>>, vector<1x128xf32>
    %36 = vector.broadcast %35 : vector<1x128xf32> to vector<64x128xf32>
    %37 = arith.addf %34, %36 : vector<64x128xf32>
    %38 = math.tanh %37 : vector<64x128xf32>
    %c0_28 = arith.constant 0 : index
    %c0_29 = arith.constant 0 : index
    %39 = vector.load %arg12[%c0_28, %c0_29] : memref<64x128xf32, #tpu.memory_space<vmem>>, vector<64x128xf32>
    tpu.vector_store %arg12[%c0_28, %c0_29], %38 {strides = array<i32>} : memref<64x128xf32, #tpu.memory_space<vmem>>, vector<64x128xf32>,
    return
  }
  func.func @transform_0(%arg0: i32) -> (i32, i32) {
    %c0_i32 = arith.constant 0 : i32
    %c0_i32_0 = arith.constant 0 : i32
    return %arg0, %c0_i32 : i32, i32
  }
  func.func @transform_1(%arg0: i32) -> (i32, i32) {
    %c0_i32 = arith.constant 0 : i32
    %c0_i32_0 = arith.constant 0 : i32
    %c0_i32_1 = arith.constant 0 : i32
    return %c0_i32, %c0_i32_0 : i32, i32
  }
  func.func @transform_2(%arg0: i32) -> (i32, i32) {
    %c0_i32 = arith.constant 0 : i32
    %c0_i32_0 = arith.constant 0 : i32
    %c0_i32_1 = arith.constant 0 : i32
    return %c0_i32, %c0_i32_0 : i32, i32
  }
  func.func @transform_3(%arg0: i32) -> (i32, i32) {
    %c0_i32 = arith.constant 0 : i32
    %c0_i32_0 = arith.constant 0 : i32
    %c0_i32_1 = arith.constant 0 : i32
    return %c0_i32, %c0_i32_0 : i32, i32
  }
  func.func @transform_4(%arg0: i32) -> (i32, i32) {
    %c0_i32 = arith.constant 0 : i32
    %c0_i32_0 = arith.constant 0 : i32
    %c0_i32_1 = arith.constant 0 : i32
    return %c0_i32, %c0_i32_0 : i32, i32
  }
  func.func @transform_5(%arg0: i32) -> (i32, i32) {
    %c0_i32 = arith.constant 0 : i32
    %c0_i32_0 = arith.constant 0 : i32
    %c0_i32_1 = arith.constant 0 : i32
    return %c0_i32, %c0_i32_0 : i32, i32
  }
  func.func @transform_6(%arg0: i32) -> (i32, i32) {
    %c0_i32 = arith.constant 0 : i32
    %c0_i32_0 = arith.constant 0 : i32
    %c0_i32_1 = arith.constant 0 : i32
    return %c0_i32, %c0_i32_0 : i32, i32
  }
  func.func @transform_7(%arg0: i32) -> (i32, i32) {
    %c0_i32 = arith.constant 0 : i32
    %c0_i32_0 = arith.constant 0 : i32
    %c0_i32_1 = arith.constant 0 : i32
    return %c0_i32, %c0_i32_0 : i32, i32
  }
  func.func @transform_8(%arg0: i32) -> (i32, i32) {
    %c0_i32 = arith.constant 0 : i32
    %c0_i32_0 = arith.constant 0 : i32
    %c0_i32_1 = arith.constant 0 : i32
    return %c0_i32, %c0_i32_0 : i32, i32
  }
  func.func @transform_9(%arg0: i32) -> (i32, i32) {
    %c0_i32 = arith.constant 0 : i32
    %c0_i32_0 = arith.constant 0 : i32
    %c0_i32_1 = arith.constant 0 : i32
    return %c0_i32, %c0_i32_0 : i32, i32
  }
  func.func @transform_10(%arg0: i32) -> (i32, i32) {
    %c0_i32 = arith.constant 0 : i32
    %c0_i32_0 = arith.constant 0 : i32
    %c0_i32_1 = arith.constant 0 : i32
    return %c0_i32, %c0_i32_0 : i32, i32
  }
  func.func @transform_11(%arg0: i32) -> (i32, i32) {
    %c0_i32 = arith.constant 0 : i32
    %c0_i32_0 = arith.constant 0 : i32
    return %arg0, %c0_i32 : i32, i32
  }
}

</mosaic_0001>

<llo_original>
// kernel: tpu_custom_call.1
$region0: #{tpu_custom_call.1}
  #allocation0 [shape = 'u32[]', space=smem, size = 0x4, offset = 0x4, fixed_abs, tag = 'smem constant byte address 0x4 - core index']
  #allocation1 [shape = 'u32[144,128]{1,0:T(1,128)}', space=vmem, size = 0x12000, scoped, tag = 'internal scratch']
  %s0 = inlined_call_operand.vmem [shape: f32[64,32], index: 0, kind: input, shape index: {}]
  %s1 = inlined_call_operand.vmem [shape: bf16[32,512], index: 1, kind: input, shape index: {}]
  %s2 = inlined_call_operand.vmem [shape: f32[1,512], index: 2, kind: input, shape index: {}]
  %s3 = inlined_call_operand.hbm [shape: bf16[512,512], index: 3, kind: input, shape index: {}]
  %s4 = inlined_call_operand.vmem [shape: f32[1,512], index: 4, kind: input, shape index: {}]
  %s5 = inlined_call_operand.vmem [shape: bf16[512,8], index: 5, kind: input, shape index: {}]
  %s6 = inlined_call_operand.vmem [shape: f32[1,8], index: 6, kind: input, shape index: {}]
  %s7 = inlined_call_operand.vmem [shape: bf16[8,256], index: 7, kind: input, shape index: {}]
  %s8 = inlined_call_operand.vmem [shape: f32[1,256], index: 8, kind: input, shape index: {}]
  %s9 = inlined_call_operand.vmem [shape: bf16[256,128], index: 9, kind: input, shape index: {}]
  %s10 = inlined_call_operand.vmem [shape: f32[1,128], index: 10, kind: input, shape index: {}]
  %s11 = inlined_call_operand.hbm [shape: f32[64,128], index: 11, kind: output, shape index: {}]
  %s12 = sld [smem:[#allocation0]]
  $region58: #{tpu_custom_call.1} parent=0
    _
  %s14 = ssub.s32 1, %s12
  %s15 = scalar_select 0, %s14, %s12
  $region1: #{tpu_custom_call.1} parent=0
    #allocation2 [shape = 'u8[524288]{0}', space=vmem, size = 0x80000, scoped, tag = 'input window, operand 3, single buffered']
    #allocation3 [shape = 's32[1]{0}', space=sflag, size = 0x4, scoped, tag = 'scoped memory for tpu_custom_call.1']
    #allocation4 [shape = 's32[1]{0}', space=sflag, size = 0x4, scoped, tag = 'scoped memory for tpu_custom_call.1']
    #allocation5 [shape = 'u8[32768]{0}', space=vmem, size = 0x8000, scoped, tag = 'output window, operand 0, single buffered']
    %16 = vsyncpa [#allocation3], 0
    %17 = vsyncpa [#allocation4], 0
    // Predicated region
    $region2: #{tpu_custom_call.1} parent=1 // pred_check
      _
    $region3: #{tpu_custom_call.1} parent=1 // pred_check_branch
      %19 = sbr.rel (0) target = $region5
    $region4: #{tpu_custom_call.1} parent=1 // pred_region
      _
    $region5: #{tpu_custom_call.1} parent=1 // pred_fallthru
      _
    // Predicated region
    $region6: #{tpu_custom_call.1} parent=1 // pred_check
      _
    $region7: #{tpu_custom_call.1} parent=1 // pred_check_branch
      %21 = sbr.rel (0) target = $region9
    $region8: #{tpu_custom_call.1} parent=1 // pred_region
      _
    $region9: #{tpu_custom_call.1} parent=1 // pred_fallthru
      _
    // Predicated region
    $region10: #{tpu_custom_call.1} parent=1 // pred_check
      _
    $region11: #{tpu_custom_call.1} parent=1 // pred_check_branch
      %23 = sbr.rel (0) target = $region13
    $region12: #{tpu_custom_call.1} parent=1 // pred_region
      _
    $region13: #{tpu_custom_call.1} parent=1 // pred_fallthru
      _
    // Predicated region
    $region14: #{tpu_custom_call.1} parent=1 // pred_check
      _
    $region15: #{tpu_custom_call.1} parent=1 // pred_check_branch
      %25 = sbr.rel (0) target = $region17
    $region16: #{tpu_custom_call.1} parent=1 // pred_region
      %s27 = ssub.s32 16384, 16384
      %28 = vsyncadd [#allocation3], %s27
      %s29 = sshll.u32 [#allocation2], 4
      %s30 = int_to_ptr.vmem [resolvable:$true] %s29
      %35 = dma.hbm_to_vmem [thread:$0]  %s3, 16384, %s30, [#allocation3], 256, 256, 16
    $region17: #{tpu_custom_call.1} parent=1 // pred_fallthru
      _
    // Predicated region
    $region18: #{tpu_custom_call.1} parent=1 // pred_check
      _
    $region19: #{tpu_custom_call.1} parent=1 // pred_check_branch
      %37 = sbr.rel (0) target = $region21
    $region20: #{tpu_custom_call.1} parent=1 // pred_region
      _
    $region21: #{tpu_custom_call.1} parent=1 // pred_fallthru
      _
    // Predicated region
    $region22: #{tpu_custom_call.1} parent=1 // pred_check
      _
    $region23: #{tpu_custom_call.1} parent=1 // pred_check_branch
      %39 = sbr.rel (0) target = $region25
    $region24: #{tpu_custom_call.1} parent=1 // pred_region
      _
    $region25: #{tpu_custom_call.1} parent=1 // pred_fallthru
      _
    // Predicated region
    $region26: #{tpu_custom_call.1} parent=1 // pred_check
      _
    $region27: #{tpu_custom_call.1} parent=1 // pred_check_branch
      %41 = sbr.rel (0) target = $region29
    $region28: #{tpu_custom_call.1} parent=1 // pred_region
      _
    $region29: #{tpu_custom_call.1} parent=1 // pred_fallthru
      _
    // Predicated region
    $region30: #{tpu_custom_call.1} parent=1 // pred_check
      _
    $region31: #{tpu_custom_call.1} parent=1 // pred_check_branch
      %43 = sbr.rel (0) target = $region33
    $region32: #{tpu_custom_call.1} parent=1 // pred_region
      _
    $region33: #{tpu_custom_call.1} parent=1 // pred_fallthru
      _
    // Predicated region
    $region34: #{tpu_custom_call.1} parent=1 // pred_check
      _
    $region35: #{tpu_custom_call.1} parent=1 // pred_check_branch
      %45 = sbr.rel (0) target = $region37
    $region36: #{tpu_custom_call.1} parent=1 // pred_region
      _
    $region37: #{tpu_custom_call.1} parent=1 // pred_fallthru
      _
    // Predicated region
    $region38: #{tpu_custom_call.1} parent=1 // pred_check
      _
    $region39: #{tpu_custom_call.1} parent=1 // pred_check_branch
      %47 = sbr.rel (0) target = $region41
    $region40: #{tpu_custom_call.1} parent=1 // pred_region
      _
    $region41: #{tpu_custom_call.1} parent=1 // pred_fallthru
      _
    // Predicated region
    $region42: #{tpu_custom_call.1} parent=1 // pred_check
      _
    $region43: #{tpu_custom_call.1} parent=1 // pred_check_branch
      %49 = sbr.rel (0) target = $region45
    $region44: #{tpu_custom_call.1} parent=1 // pred_region
      _
    $region45: #{tpu_custom_call.1} parent=1 // pred_fallthru
      _
    // Predicated region
    $region46: #{tpu_custom_call.1} parent=1 // pred_check
      _
    $region47: #{tpu_custom_call.1} parent=1 // pred_check_branch
      %51 = sbr.rel (0) target = $region49
    $region48: #{tpu_custom_call.1} parent=1 // pred_region
      %52 = dma.done [#allocation3], 16384
    $region49: #{tpu_custom_call.1} parent=1 // pred_fallthru
      _
    %v54 = vld [vmem:[%s0] sm:$0xff]
    %v55 = vld [vmem:[%s0 + $0x8] sm:$0xff]
    %v56 = vld [vmem:[%s0 + $0x10] sm:$0xff]
    %v57 = vld [vmem:[%s0 + $0x18] sm:$0xff]
    %v58 = vld [vmem:[%s0 + $0x20] sm:$0xff]
    %v59 = vld [vmem:[%s0 + $0x28] sm:$0xff]
    %v60 = vld [vmem:[%s0 + $0x30] sm:$0xff]
    %v61 = vld [vmem:[%s0 + $0x38] sm:$0xff]
    %v62 = vpack.c.bf16 %v55, %v54
    %v63 = vpack.c.bf16 %v57, %v56
    %v64 = vpack.c.bf16 %v59, %v58
    %v65 = vpack.c.bf16 %v61, %v60
    %v66 = vld [vmem:[%s1] sm:$0xff]
    %v67 = vld [vmem:[%s1 + $0x8] sm:$0xff]
    %v68 = vld [vmem:[%s1 + $0x10] sm:$0xff]
    %v69 = vld [vmem:[%s1 + $0x18] sm:$0xff]
    %v70 = vld [vmem:[%s1 + $0x20] sm:$0xff]
    %v71 = vld [vmem:[%s1 + $0x28] sm:$0xff]
    %v72 = vld [vmem:[%s1 + $0x30] sm:$0xff]
    %v73 = vld [vmem:[%s1 + $0x38] sm:$0xff]
    %v74 = vld [vmem:[%s2] sm:$0xf]
    %v76 = vlaneseq
    %v77 = vshrl.u32 %v76, 7
    %v78 = vsub.s32 0, %v77
    %v79 = vrot.slane %v74, %v78
    %v80 = vlaneseq
    %v81 = vshrl.u32 %v80, 7
    %v82 = vsub.s32 1, %v81
    %v83 = vrot.slane %v74, %v82
    %v84 = vlaneseq
    %v85 = vshrl.u32 %v84, 7
    %v86 = vsub.s32 2, %v85
    %v87 = vrot.slane %v74, %v86
    %v88 = vlaneseq
    %v89 = vshrl.u32 %v88, 7
    %v90 = vsub.s32 3, %v89
    %v91 = vrot.slane %v74, %v90
    %v104 = vunpack.c.l.b16 %v66
    %v105 = vunpack.c.h.b16 %v66
    %v106 = vunpack.c.l.b16 %v67
    %v107 = vunpack.c.h.b16 %v67
    %v108 = vunpack.c.l.b16 %v68
    %v109 = vunpack.c.h.b16 %v68
    %v110 = vunpack.c.l.b16 %v69
    %v111 = vunpack.c.h.b16 %v69
    %v112 = vunpack.c.l.b16 %v70
    %v113 = vunpack.c.h.b16 %v70
    %v114 = vunpack.c.l.b16 %v71
    %v115 = vunpack.c.h.b16 %v71
    %v116 = vunpack.c.l.b16 %v72
    %v117 = vunpack.c.h.b16 %v72
    %v118 = vunpack.c.l.b16 %v73
    %v119 = vunpack.c.h.b16 %v73
    %v120 = vpack.c.b16 %v108, %v104
    %v121 = vpack.c.b16 %v109, %v105
    %v122 = vpack.c.b16 %v110, %v106
    %v123 = vpack.c.b16 %v111, %v107
    %v124 = vpack.c.b16 %v116, %v112
    %v125 = vpack.c.b16 %v117, %v113
    %v126 = vpack.c.b16 %v118, %v114
    %v127 = vpack.c.b16 %v119, %v115
    %vm136 = vcmask 261120
    %v138 = vsel %vm136, %v62, 0
    %v141 = vsel %vm136, %v63, 0
    %v144 = vsel %vm136, %v64, 0
    %v147 = vsel %vm136, %v65, 0
    %149 = vmatprep.subr.bf16.mxu0 %v121
    %150 = vmatpush1.bf16.msra.mxu0 %v120
    %151 = vmatprep.subr.bf16.mxu0 %v125
    %152 = vmatpush1.bf16.msra.mxu0 %v124
    %153 = vmatprep.subr.bf16.mxu0 0
    %154 = vmatpush1.bf16.msra.mxu0 0
    %155 = vmatprep.subr.bf16.mxu0 0
    %156 = vmatpush1.bf16.msra.mxu0 0
    %157 = vmatprep.subr.bf16.mxu0 0
    %158 = vmatpush1.bf16.msra.mxu0 0
    %159 = vmatprep.subr.bf16.mxu0 0
    %160 = vmatpush1.bf16.msra.mxu0 0
    %161 = vmatprep.subr.bf16.mxu0 0
    %162 = vmatpush1.bf16.msra.mxu0 0
    %163 = vmatprep.subr.bf16.mxu0 0
    %164 = vmatpush1.bf16.msra.mxu0 0
    %165 = vmatprep.subr.bf16.mxu0 0
    %166 = vmatpush1.bf16.msra.mxu0 0
    %167 = vmatprep.subr.bf16.mxu0 0
    %168 = vmatpush1.bf16.msra.mxu0 0
    %169 = vmatprep.subr.bf16.mxu0 0
    %170 = vmatpush1.bf16.msra.mxu0 0
    %171 = vmatprep.subr.bf16.mxu0 0
    %172 = vmatpush1.bf16.msra.mxu0 0
    %173 = vmatprep.subr.bf16.mxu0 0
    %174 = vmatpush1.bf16.msra.mxu0 0
    %175 = vmatprep.subr.bf16.mxu0 0
    %176 = vmatpush1.bf16.msra.mxu0 0
    %177 = vmatprep.subr.bf16.mxu0 0
    %178 = vmatpush1.bf16.msra.mxu0 0
    %179 = vmatprep.subr.bf16.mxu0 0
    %180 = vmatpush1.bf16.msra.mxu0 0
    %181 = vmatprep.mubr.bf16.mxu0 0
    %182 = vmatmul.mubr.bf16.gmra.mrb[0].mxu0 %v138
    %v183 = vpop.f32.mrb[0].mxu0
    %v184 = vadd.f32 %v79, %v183
    %v185 = vpop.f32.mrb[0].mxu0
    %v186 = vadd.f32 %v83, %v185
    %v187 = vpop.f32.mrb[0].mxu0
    %v188 = vadd.f32 %v79, %v187
    %v189 = vpop.f32.mrb[0].mxu0
    %v190 = vadd.f32 %v83, %v189
    %191 = vmatprep.mubr.bf16.mxu0 0
    %192 = vmatmul.mubr.bf16.gmra.mrb[0].mxu0 %v141
    %v193 = vpop.f32.mrb[0].mxu0
    %v194 = vadd.f32 %v79, %v193
    %v195 = vpop.f32.mrb[0].mxu0
    %v196 = vadd.f32 %v83, %v195
    %v197 = vpop.f32.mrb[0].mxu0
    %v198 = vadd.f32 %v79, %v197
    %v199 = vpop.f32.mrb[0].mxu0
    %v200 = vadd.f32 %v83, %v199
    %201 = vmatprep.mubr.bf16.mxu0 0
    %202 = vmatmul.mubr.bf16.gmra.mrb[0].mxu0 %v144
    %v203 = vpop.f32.mrb[0].mxu0
    %v204 = vadd.f32 %v79, %v203
    %v205 = vpop.f32.mrb[0].mxu0
    %v206 = vadd.f32 %v83, %v205
    %v207 = vpop.f32.mrb[0].mxu0
    %v208 = vadd.f32 %v79, %v207
    %v209 = vpop.f32.mrb[0].mxu0
    %v210 = vadd.f32 %v83, %v209
    %211 = vmatprep.mubr.bf16.mxu0 0
    %212 = vmatmul.mubr.bf16.gmra.mrb[0].mxu0 %v147
    %v213 = vpop.f32.mrb[0].mxu0
    %v214 = vadd.f32 %v79, %v213
    %v215 = vpop.f32.mrb[0].mxu0
    %v216 = vadd.f32 %v83, %v215
    %v217 = vpop.f32.mrb[0].mxu0
    %v218 = vadd.f32 %v79, %v217
    %v219 = vpop.f32.mrb[0].mxu0
    %v220 = vadd.f32 %v83, %v219
    %221 = vdwg.mxu0
    %222 = vmatprep.subr.bf16.mxu0 %v123
    %223 = vmatpush1.bf16.msra.mxu0 %v122
    %224 = vmatprep.subr.bf16.mxu0 %v127
    %225 = vmatpush1.bf16.msra.mxu0 %v126
    %226 = vmatprep.subr.bf16.mxu0 0
    %227 = vmatpush1.bf16.msra.mxu0 0
    %228 = vmatprep.subr.bf16.mxu0 0
    %229 = vmatpush1.bf16.msra.mxu0 0
    %230 = vmatprep.subr.bf16.mxu0 0
    %231 = vmatpush1.bf16.msra.mxu0 0
    %232 = vmatprep.subr.bf16.mxu0 0
    %233 = vmatpush1.bf16.msra.mxu0 0
    %234 = vmatprep.subr.bf16.mxu0 0
    %235 = vmatpush1.bf16.msra.mxu0 0
    %236 = vmatprep.subr.bf16.mxu0 0
    %237 = vmatpush1.bf16.msra.mxu0 0
    %238 = vmatprep.subr.bf16.mxu0 0
    %239 = vmatpush1.bf16.msra.mxu0 0
    %240 = vmatprep.subr.bf16.mxu0 0
    %241 = vmatpush1.bf16.msra.mxu0 0
    %242 = vmatprep.subr.bf16.mxu0 0
    %243 = vmatpush1.bf16.msra.mxu0 0
    %244 = vmatprep.subr.bf16.mxu0 0
    %245 = vmatpush1.bf16.msra.mxu0 0
    %246 = vmatprep.subr.bf16.mxu0 0
    %247 = vmatpush1.bf16.msra.mxu0 0
    %248 = vmatprep.subr.bf16.mxu0 0
    %249 = vmatpush1.bf16.msra.mxu0 0
    %250 = vmatprep.subr.bf16.mxu0 0
    %251 = vmatpush1.bf16.msra.mxu0 0
    %252 = vmatprep.subr.bf16.mxu0 0
    %253 = vmatpush1.bf16.msra.mxu0 0
    %254 = vmatprep.mubr.bf16.mxu0 0
    %255 = vmatmul.mubr.bf16.gmra.mrb[0].mxu0 %v138
    %v256 = vpop.f32.mrb[0].mxu0
    %v257 = vadd.f32 %v87, %v256
    %v258 = vpop.f32.mrb[0].mxu0
    %v259 = vadd.f32 %v91, %v258
    %v260 = vpop.f32.mrb[0].mxu0
    %v261 = vadd.f32 %v87, %v260
    %v262 = vpop.f32.mrb[0].mxu0
    %v263 = vadd.f32 %v91, %v262
    %264 = vmatprep.mubr.bf16.mxu0 0
    %265 = vmatmul.mubr.bf16.gmra.mrb[0].mxu0 %v141
    %v266 = vpop.f32.mrb[0].mxu0
    %v267 = vadd.f32 %v87, %v266
    %v268 = vpop.f32.mrb[0].mxu0
    %v269 = vadd.f32 %v91, %v268
    %v270 = vpop.f32.mrb[0].mxu0
    %v271 = vadd.f32 %v87, %v270
    %v272 = vpop.f32.mrb[0].mxu0
    %v273 = vadd.f32 %v91, %v272
    %274 = vmatprep.mubr.bf16.mxu0 0
    %275 = vmatmul.mubr.bf16.gmra.mrb[0].mxu0 %v144
    %v276 = vpop.f32.mrb[0].mxu0
    %v277 = vadd.f32 %v87, %v276
    %v278 = vpop.f32.mrb[0].mxu0
    %v279 = vadd.f32 %v91, %v278
    %v280 = vpop.f32.mrb[0].mxu0
    %v281 = vadd.f32 %v87, %v280
    %v282 = vpop.f32.mrb[0].mxu0
    %v283 = vadd.f32 %v91, %v282
    %284 = vmatprep.mubr.bf16.mxu0 0
    %285 = vmatmul.mubr.bf16.gmra.mrb[0].mxu0 %v147
    %v286 = vpop.f32.mrb[0].mxu0
    %v287 = vadd.f32 %v87, %v286
    %v288 = vpop.f32.mrb[0].mxu0
    %v289 = vadd.f32 %v91, %v288
    %v290 = vpop.f32.mrb[0].mxu0
    %v291 = vadd.f32 %v87, %v290
    %v292 = vpop.f32.mrb[0].mxu0
    %v293 = vadd.f32 %v91, %v292
    %294 = vdwg.mxu0
    %v295 = vmax.f32 %v184, 0.0
    %v296 = vmax.f32 %v186, 0.0
    %v297 = vmax.f32 %v257, 0.0
    %v298 = vmax.f32 %v259, 0.0
    %v299 = vmax.f32 %v188, 0.0
    %v300 = vmax.f32 %v190, 0.0
    %v301 = vmax.f32 %v261, 0.0
    %v302 = vmax.f32 %v263, 0.0
    %v303 = vmax.f32 %v194, 0.0
    %v304 = vmax.f32 %v196, 0.0
    %v305 = vmax.f32 %v267, 0.0
    %v306 = vmax.f32 %v269, 0.0
    %v307 = vmax.f32 %v198, 0.0
    %v308 = vmax.f32 %v200, 0.0
    %v309 = vmax.f32 %v271, 0.0
    %v310 = vmax.f32 %v273, 0.0
    %v311 = vmax.f32 %v204, 0.0
    %v312 = vmax.f32 %v206, 0.0
    %v313 = vmax.f32 %v277, 0.0
    %v314 = vmax.f32 %v279, 0.0
    %v315 = vmax.f32 %v208, 0.0
    %v316 = vmax.f32 %v210, 0.0
    %v317 = vmax.f32 %v281, 0.0
    %v318 = vmax.f32 %v283, 0.0
    %v319 = vmax.f32 %v214, 0.0
    %v320 = vmax.f32 %v216, 0.0
    %v321 = vmax.f32 %v287, 0.0
    %v322 = vmax.f32 %v289, 0.0
    %v323 = vmax.f32 %v218, 0.0
    %v324 = vmax.f32 %v220, 0.0
    %v325 = vmax.f32 %v291, 0.0
    %v326 = vmax.f32 %v293, 0.0
    %v327 = vpack.c.bf16 %v299, %v295
    %v328 = vpack.c.bf16 %v300, %v296
    %v329 = vpack.c.bf16 %v301, %v297
    %v330 = vpack.c.bf16 %v302, %v298
    %v331 = vpack.c.bf16 %v307, %v303
    %v332 = vpack.c.bf16 %v308, %v304
    %v333 = vpack.c.bf16 %v309, %v305
    %v334 = vpack.c.bf16 %v310, %v306
    %v335 = vpack.c.bf16 %v315, %v311
    %v336 = vpack.c.bf16 %v316, %v312
    %v337 = vpack.c.bf16 %v317, %v313
    %v338 = vpack.c.bf16 %v318, %v314
    %v339 = vpack.c.bf16 %v323, %v319
    %v340 = vpack.c.bf16 %v324, %v320
    %v341 = vpack.c.bf16 %v325, %v321
    %v342 = vpack.c.bf16 %v326, %v322
    %v343 = vld [vmem:[#allocation2] sm:$0xff]
    %v344 = vld [vmem:[#allocation2 + $0x8] sm:$0xff]
    %v345 = vld [vmem:[#allocation2 + $0x10] sm:$0xff]
    %v346 = vld [vmem:[#allocation2 + $0x18] sm:$0xff]
    %v347 = vld [vmem:[#allocation2 + $0x20] sm:$0xff]
    %v348 = vld [vmem:[#allocation2 + $0x28] sm:$0xff]
    %v349 = vld [vmem:[#allocation2 + $0x30] sm:$0xff]
    %v350 = vld [vmem:[#allocation2 + $0x38] sm:$0xff]
    %v351 = vld [vmem:[#allocation2 + $0x40] sm:$0xff]
    %v352 = vld [vmem:[#allocation2 + $0x48] sm:$0xff]
    %v353 = vld [vmem:[#allocation2 + $0x50] sm:$0xff]
    %v354 = vld [vmem:[#allocation2 + $0x58] sm:$0xff]
    %v355 = vld [vmem:[#allocation2 + $0x60] sm:$0xff]
    %v356 = vld [vmem:[#allocation2 + $0x68] sm:$0xff]
    %v357 = vld [vmem:[#allocation2 + $0x70] sm:$0xff]
    %v358 = vld [vmem:[#allocation2 + $0x78] sm:$0xff]
    %v359 = vld [vmem:[#allocation2 + $0x80] sm:$0xff]
    %v360 = vld [vmem:[#allocation2 + $0x88] sm:$0xff]
    %v361 = vld [vmem:[#allocation2 + $0x90] sm:$0xff]
    %v362 = vld [vmem:[#allocation2 + $0x98] sm:$0xff]
    %v363 = vld [vmem:[#allocation2 + $0xa0] sm:$0xff]
    %v364 = vld [vmem:[#allocation2 + $0xa8] sm:$0xff]
    %v365 = vld [vmem:[#allocation2 + $0xb0] sm:$0xff]
    %v366 = vld [vmem:[#allocation2 + $0xb8] sm:$0xff]
    %v367 = vld [vmem:[#allocation2 + $0xc0] sm:$0xff]
    %v368 = vld [vmem:[#allocation2 + $0xc8] sm:$0xff]
    %v369 = vld [vmem:[#allocation2 + $0xd0] sm:$0xff]
    %v370 = vld [vmem:[#allocation2 + $0xd8] sm:$0xff]
    %v371 = vld [vmem:[#allocation2 + $0xe0] sm:$0xff]
    %v372 = vld [vmem:[#allocation2 + $0xe8] sm:$0xff]
    %v373 = vld [vmem:[#allocation2 + $0xf0] sm:$0xff]
    %v374 = vld [vmem:[#allocation2 + $0xf8] sm:$0xff]
    %v375 = vld [vmem:[#allocation2 + $0x100] sm:$0xff]
    %v376 = vld [vmem:[#allocation2 + $0x108] sm:$0xff]
    %v377 = vld [vmem:[#allocation2 + $0x110] sm:$0xff]
    %v378 = vld [vmem:[#allocation2 + $0x118] sm:$0xff]
    %v379 = vld [vmem:[#allocation2 + $0x120] sm:$0xff]
    %v380 = vld [vmem:[#allocation2 + $0x128] sm:$0xff]
    %v381 = vld [vmem:[#allocation2 + $0x130] sm:$0xff]
    %v382 = vld [vmem:[#allocation2 + $0x138] sm:$0xff]
    %v383 = vld [vmem:[#allocation2 + $0x140] sm:$0xff]
    %v384 = vld [vmem:[#allocation2 + $0x148] sm:$0xff]
    %v385 = vld [vmem:[#allocation2 + $0x150] sm:$0xff]
    %v386 = vld [vmem:[#allocation2 + $0x158] sm:$0xff]
    %v387 = vld [vmem:[#allocation2 + $0x160] sm:$0xff]
    %v388 = vld [vmem:[#allocation2 + $0x168] sm:$0xff]
    %v389 = vld [vmem:[#allocation2 + $0x170] sm:$0xff]
    %v390 = vld [vmem:[#allocation2 + $0x178] sm:$0xff]
    %v391 = vld [vmem:[#allocation2 + $0x180] sm:$0xff]
    %v392 = vld [vmem:[#allocation2 + $0x188] sm:$0xff]
    %v393 = vld [vmem:[#allocation2 + $0x190] sm:$0xff]
    %v394 = vld [vmem:[#allocation2 + $0x198] sm:$0xff]
    %v395 = vld [vmem:[#allocation2 + $0x1a0] sm:$0xff]
    %v396 = vld [vmem:[#allocation2 + $0x1a8] sm:$0xff]
    %v397 = vld [vmem:[#allocation2 + $0x1b0] sm:$0xff]
    %v398 = vld [vmem:[#allocation2 + $0x1b8] sm:$0xff]
    %v399 = vld [vmem:[#allocation2 + $0x1c0] sm:$0xff]
    %v400 = vld [vmem:[#allocation2 + $0x1c8] sm:$0xff]
    %v401 = vld [vmem:[#allocation2 + $0x1d0] sm:$0xff]
    %v402 = vld [vmem:[#allocation2 + $0x1d8] sm:$0xff]
    %v403 = vld [vmem:[#allocation2 + $0x1e0] sm:$0xff]
    %v404 = vld [vmem:[#allocation2 + $0x1e8] sm:$0xff]
    %v405 = vld [vmem:[#allocation2 + $0x1f0] sm:$0xff]
    %v406 = vld [vmem:[#allocation2 + $0x1f8] sm:$0xff]
    %v407 = vld [vmem:[#allocation2 + $0x200] sm:$0xff]
    %v408 = vld [vmem:[#allocation2 + $0x208] sm:$0xff]
    %v409 = vld [vmem:[#allocation2 + $0x210] sm:$0xff]
    %v410 = vld [vmem:[#allocation2 + $0x218] sm:$0xff]
    %v411 = vld [vmem:[#allocation2 + $0x220] sm:$0xff]
    %v412 = vld [vmem:[#allocation2 + $0x228] sm:$0xff]
    %v413 = vld [vmem:[#allocation2 + $0x230] sm:$0xff]
    %v414 = vld [vmem:[#allocation2 + $0x238] sm:$0xff]
    %v415 = vld [vmem:[#allocation2 + $0x240] sm:$0xff]
    %v416 = vld [vmem:[#allocation2 + $0x248] sm:$0xff]
    %v417 = vld [vmem:[#allocation2 + $0x250] sm:$0xff]
    %v418 = vld [vmem:[#allocation2 + $0x258] sm:$0xff]
    %v419 = vld [vmem:[#allocation2 + $0x260] sm:$0xff]
    %v420 = vld [vmem:[#allocation2 + $0x268] sm:$0xff]
    %v421 = vld [vmem:[#allocation2 + $0x270] sm:$0xff]
    %v422 = vld [vmem:[#allocation2 + $0x278] sm:$0xff]
    %v423 = vld [vmem:[#allocation2 + $0x280] sm:$0xff]
    %v424 = vld [vmem:[#allocation2 + $0x288] sm:$0xff]
    %v425 = vld [vmem:[#allocation2 + $0x290] sm:$0xff]
    %v426 = vld [vmem:[#allocation2 + $0x298] sm:$0xff]
    %v427 = vld [vmem:[#allocation2 + $0x2a0] sm:$0xff]
    %v428 = vld [vmem:[#allocation2 + $0x2a8] sm:$0xff]
    %v429 = vld [vmem:[#allocation2 + $0x2b0] sm:$0xff]
    %v430 = vld [vmem:[#allocation2 + $0x2b8] sm:$0xff]
    %v431 = vld [vmem:[#allocation2 + $0x2c0] sm:$0xff]
    %v432 = vld [vmem:[#allocation2 + $0x2c8] sm:$0xff]
    %v433 = vld [vmem:[#allocation2 + $0x2d0] sm:$0xff]
    %v434 = vld [vmem:[#allocation2 + $0x2d8] sm:$0xff]
    %v435 = vld [vmem:[#allocation2 + $0x2e0] sm:$0xff]
    %v436 = vld [vmem:[#allocation2 + $0x2e8] sm:$0xff]
    %v437 = vld [vmem:[#allocation2 + $0x2f0] sm:$0xff]
    %v438 = vld [vmem:[#allocation2 + $0x2f8] sm:$0xff]
    %v439 = vld [vmem:[#allocation2 + $0x300] sm:$0xff]
    %v440 = vld [vmem:[#allocation2 + $0x308] sm:$0xff]
    %v441 = vld [vmem:[#allocation2 + $0x310] sm:$0xff]
    %v442 = vld [vmem:[#allocation2 + $0x318] sm:$0xff]
    %v443 = vld [vmem:[#allocation2 + $0x320] sm:$0xff]
    %v444 = vld [vmem:[#allocation2 + $0x328] sm:$0xff]
    %v445 = vld [vmem:[#allocation2 + $0x330] sm:$0xff]
    %v446 = vld [vmem:[#allocation2 + $0x338] sm:$0xff]
    %v447 = vld [vmem:[#allocation2 + $0x340] sm:$0xff]
    %v448 = vld [vmem:[#allocation2 + $0x348] sm:$0xff]
    %v449 = vld [vmem:[#allocation2 + $0x350] sm:$0xff]
    %v450 = vld [vmem:[#allocation2 + $0x358] sm:$0xff]
    %v451 = vld [vmem:[#allocation2 + $0x360] sm:$0xff]
    %v452 = vld [vmem:[#allocation2 + $0x368] sm:$0xff]
    %v453 = vld [vmem:[#allocation2 + $0x370] sm:$0xff]
    %v454 = vld [vmem:[#allocation2 + $0x378] sm:$0xff]
    %v455 = vld [vmem:[#allocation2 + $0x380] sm:$0xff]
    %v456 = vld [vmem:[#allocation2 + $0x388] sm:$0xff]
    %v457 = vld [vmem:[#allocation2 + $0x390] sm:$0xff]
    %v458 = vld [vmem:[#allocation2 + $0x398] sm:$0xff]
    %v459 = vld [vmem:[#allocation2 + $0x3a0] sm:$0xff]
    %v460 = vld [vmem:[#allocation2 + $0x3a8] sm:$0xff]
    %v461 = vld [vmem:[#allocation2 + $0x3b0] sm:$0xff]
    %v462 = vld [vmem:[#allocation2 + $0x3b8] sm:$0xff]
    %v463 = vld [vmem:[#allocation2 + $0x3c0] sm:$0xff]
    %v464 = vld [vmem:[#allocation2 + $0x3c8] sm:$0xff]
    %v465 = vld [vmem:[#allocation2 + $0x3d0] sm:$0xff]
    %v466 = vld [vmem:[#allocation2 + $0x3d8] sm:$0xff]
    %v467 = vld [vmem:[#allocation2 + $0x3e0] sm:$0xff]
    %v468 = vld [vmem:[#allocation2 + $0x3e8] sm:$0xff]
    %v469 = vld [vmem:[#allocation2 + $0x3f0] sm:$0xff]
    %v470 = vld [vmem:[#allocation2 + $0x3f8] sm:$0xff]
    %v471 = vld [vmem:[%s4] sm:$0xf]
    %v473 = vlaneseq
    %v474 = vshrl.u32 %v473, 7
    %v475 = vsub.s32 0, %v474
    %v476 = vrot.slane %v471, %v475
    %v477 = vlaneseq
    %v478 = vshrl.u32 %v477, 7
    %v479 = vsub.s32 1, %v478
    %v480 = vrot.slane %v471, %v479
    %v481 = vlaneseq
    %v482 = vshrl.u32 %v481, 7
    %v483 = vsub.s32 2, %v482
    %v484 = vrot.slane %v471, %v483
    %v485 = vlaneseq
    %v486 = vshrl.u32 %v485, 7
    %v487 = vsub.s32 3, %v486
    %v488 = vrot.slane %v471, %v487
    %v621 = vunpack.c.l.b16 %v343
    %v622 = vunpack.c.h.b16 %v343
    %v623 = vunpack.c.l.b16 %v344
    %v624 = vunpack.c.h.b16 %v344
    %v625 = vunpack.c.l.b16 %v345
    %v626 = vunpack.c.h.b16 %v345
    %v627 = vunpack.c.l.b16 %v346
    %v628 = vunpack.c.h.b16 %v346
    %v629 = vunpack.c.l.b16 %v347
    %v630 = vunpack.c.h.b16 %v347
    %v631 = vunpack.c.l.b16 %v348
    %v632 = vunpack.c.h.b16 %v348
    %v633 = vunpack.c.l.b16 %v349
    %v634 = vunpack.c.h.b16 %v349
    %v635 = vunpack.c.l.b16 %v350
    %v636 = vunpack.c.h.b16 %v350
    %v637 = vunpack.c.l.b16 %v351
    %v638 = vunpack.c.h.b16 %v351
    %v639 = vunpack.c.l.b16 %v352
    %v640 = vunpack.c.h.b16 %v352
    %v641 = vunpack.c.l.b16 %v353
    %v642 = vunpack.c.h.b16 %v353
    %v643 = vunpack.c.l.b16 %v354
    %v644 = vunpack.c.h.b16 %v354
    %v645 = vunpack.c.l.b16 %v355
    %v646 = vunpack.c.h.b16 %v355
    %v647 = vunpack.c.l.b16 %v356
    %v648 = vunpack.c.h.b16 %v356
    %v649 = vunpack.c.l.b16 %v357
    %v650 = vunpack.c.h.b16 %v357
    %v651 = vunpack.c.l.b16 %v358
    %v652 = vunpack.c.h.b16 %v358
    %v653 = vunpack.c.l.b16 %v359
    %v654 = vunpack.c.h.b16 %v359
    %v655 = vunpack.c.l.b16 %v360
    %v656 = vunpack.c.h.b16 %v360
    %v657 = vunpack.c.l.b16 %v361
    %v658 = vunpack.c.h.b16 %v361
    %v659 = vunpack.c.l.b16 %v362
    %v660 = vunpack.c.h.b16 %v362
    %v661 = vunpack.c.l.b16 %v363
    %v662 = vunpack.c.h.b16 %v363
    %v663 = vunpack.c.l.b16 %v364
    %v664 = vunpack.c.h.b16 %v364
    %v665 = vunpack.c.l.b16 %v365
    %v666 = vunpack.c.h.b16 %v365
    %v667 = vunpack.c.l.b16 %v366
    %v668 = vunpack.c.h.b16 %v366
    %v669 = vunpack.c.l.b16 %v367
    %v670 = vunpack.c.h.b16 %v367
    %v671 = vunpack.c.l.b16 %v368
    %v672 = vunpack.c.h.b16 %v368
    %v673 = vunpack.c.l.b16 %v369
    %v674 = vunpack.c.h.b16 %v369
    %v675 = vunpack.c.l.b16 %v370
    %v676 = vunpack.c.h.b16 %v370
    %v677 = vunpack.c.l.b16 %v371
    %v678 = vunpack.c.h.b16 %v371
    %v679 = vunpack.c.l.b16 %v372
    %v680 = vunpack.c.h.b16 %v372
    %v681 = vunpack.c.l.b16 %v373
    %v682 = vunpack.c.h.b16 %v373
    %v683 = vunpack.c.l.b16 %v374
    %v684 = vunpack.c.h.b16 %v374
    %v685 = vunpack.c.l.b16 %v375
    %v686 = vunpack.c.h.b16 %v375
    %v687 = vunpack.c.l.b16 %v376
    %v688 = vunpack.c.h.b16 %v376
    %v689 = vunpack.c.l.b16 %v377
    %v690 = vunpack.c.h.b16 %v377
    %v691 = vunpack.c.l.b16 %v378
    %v692 = vunpack.c.h.b16 %v378
    %v693 = vunpack.c.l.b16 %v379
    %v694 = vunpack.c.h.b16 %v379
    %v695 = vunpack.c.l.b16 %v380
    %v696 = vunpack.c.h.b16 %v380
    %v697 = vunpack.c.l.b16 %v381
    %v698 = vunpack.c.h.b16 %v381
    %v699 = vunpack.c.l.b16 %v382
    %v700 = vunpack.c.h.b16 %v382
    %v701 = vunpack.c.l.b16 %v383
    %v702 = vunpack.c.h.b16 %v383
    %v703 = vunpack.c.l.b16 %v384
    %v704 = vunpack.c.h.b16 %v384
    %v705 = vunpack.c.l.b16 %v385
    %v706 = vunpack.c.h.b16 %v385
    %v707 = vunpack.c.l.b16 %v386
    %v708 = vunpack.c.h.b16 %v386
    %v709 = vunpack.c.l.b16 %v387
    %v710 = vunpack.c.h.b16 %v387
    %v711 = vunpack.c.l.b16 %v388
    %v712 = vunpack.c.h.b16 %v388
    %v713 = vunpack.c.l.b16 %v389
    %v714 = vunpack.c.h.b16 %v389
    %v715 = vunpack.c.l.b16 %v390
    %v716 = vunpack.c.h.b16 %v390
    %v717 = vunpack.c.l.b16 %v391
    %v718 = vunpack.c.h.b16 %v391
    %v719 = vunpack.c.l.b16 %v392
    %v720 = vunpack.c.h.b16 %v392
    %v721 = vunpack.c.l.b16 %v393
    %v722 = vunpack.c.h.b16 %v393
    %v723 = vunpack.c.l.b16 %v394
    %v724 = vunpack.c.h.b16 %v394
    %v725 = vunpack.c.l.b16 %v395
    %v726 = vunpack.c.h.b16 %v395
    %v727 = vunpack.c.l.b16 %v396
    %v728 = vunpack.c.h.b16 %v396
    %v729 = vunpack.c.l.b16 %v397
    %v730 = vunpack.c.h.b16 %v397
    %v731 = vunpack.c.l.b16 %v398
    %v732 = vunpack.c.h.b16 %v398
    %v733 = vunpack.c.l.b16 %v399
    %v734 = vunpack.c.h.b16 %v399
    %v735 = vunpack.c.l.b16 %v400
    %v736 = vunpack.c.h.b16 %v400
    %v737 = vunpack.c.l.b16 %v401
    %v738 = vunpack.c.h.b16 %v401
    %v739 = vunpack.c.l.b16 %v402
    %v740 = vunpack.c.h.b16 %v402
    %v741 = vunpack.c.l.b16 %v403
    %v742 = vunpack.c.h.b16 %v403
    %v743 = vunpack.c.l.b16 %v404
    %v744 = vunpack.c.h.b16 %v404
    %v745 = vunpack.c.l.b16 %v405
    %v746 = vunpack.c.h.b16 %v405
    %v747 = vunpack.c.l.b16 %v406
    %v748 = vunpack.c.h.b16 %v406
    %v749 = vunpack.c.l.b16 %v407
    %v750 = vunpack.c.h.b16 %v407
    %v751 = vunpack.c.l.b16 %v408
    %v752 = vunpack.c.h.b16 %v408
    %v753 = vunpack.c.l.b16 %v409
    %v754 = vunpack.c.h.b16 %v409
    %v755 = vunpack.c.l.b16 %v410
    %v756 = vunpack.c.h.b16 %v410
    %v757 = vunpack.c.l.b16 %v411
    %v758 = vunpack.c.h.b16 %v411
    %v759 = vunpack.c.l.b16 %v412
    %v760 = vunpack.c.h.b16 %v412
    %v761 = vunpack.c.l.b16 %v413
    %v762 = vunpack.c.h.b16 %v413
    %v763 = vunpack.c.l.b16 %v414
    %v764 = vunpack.c.h.b16 %v414
    %v765 = vunpack.c.l.b16 %v415
    %v766 = vunpack.c.h.b16 %v415
    %v767 = vunpack.c.l.b16 %v416
    %v768 = vunpack.c.h.b16 %v416
    %v769 = vunpack.c.l.b16 %v417
    %v770 = vunpack.c.h.b16 %v417
    %v771 = vunpack.c.l.b16 %v418
    %v772 = vunpack.c.h.b16 %v418
    %v773 = vunpack.c.l.b16 %v419
    %v774 = vunpack.c.h.b16 %v419
    %v775 = vunpack.c.l.b16 %v420
    %v776 = vunpack.c.h.b16 %v420
    %v777 = vunpack.c.l.b16 %v421
    %v778 = vunpack.c.h.b16 %v421
    %v779 = vunpack.c.l.b16 %v422
    %v780 = vunpack.c.h.b16 %v422
    %v781 = vunpack.c.l.b16 %v423
    %v782 = vunpack.c.h.b16 %v423
    %v783 = vunpack.c.l.b16 %v424
    %v784 = vunpack.c.h.b16 %v424
    %v785 = vunpack.c.l.b16 %v425
    %v786 = vunpack.c.h.b16 %v425
    %v787 = vunpack.c.l.b16 %v426
    %v788 = vunpack.c.h.b16 %v426
    %v789 = vunpack.c.l.b16 %v427
    %v790 = vunpack.c.h.b16 %v427
    %v791 = vunpack.c.l.b16 %v428
    %v792 = vunpack.c.h.b16 %v428
    %v793 = vunpack.c.l.b16 %v429
    %v794 = vunpack.c.h.b16 %v429
    %v795 = vunpack.c.l.b16 %v430
    %v796 = vunpack.c.h.b16 %v430
    %v797 = vunpack.c.l.b16 %v431
    %v798 = vunpack.c.h.b16 %v431
    %v799 = vunpack.c.l.b16 %v432
    %v800 = vunpack.c.h.b16 %v432
    %v801 = vunpack.c.l.b16 %v433
    %v802 = vunpack.c.h.b16 %v433
    %v803 = vunpack.c.l.b16 %v434
    %v804 = vunpack.c.h.b16 %v434
    %v805 = vunpack.c.l.b16 %v435
    %v806 = vunpack.c.h.b16 %v435
    %v807 = vunpack.c.l.b16 %v436
    %v808 = vunpack.c.h.b16 %v436
    %v809 = vunpack.c.l.b16 %v437
    %v810 = vunpack.c.h.b16 %v437
    %v811 = vunpack.c.l.b16 %v438
    %v812 = vunpack.c.h.b16 %v438
    %v813 = vunpack.c.l.b16 %v439
    %v814 = vunpack.c.h.b16 %v439
    %v815 = vunpack.c.l.b16 %v440
    %v816 = vunpack.c.h.b16 %v440
    %v817 = vunpack.c.l.b16 %v441
    %v818 = vunpack.c.h.b16 %v441
    %v819 = vunpack.c.l.b16 %v442
    %v820 = vunpack.c.h.b16 %v442
    %v821 = vunpack.c.l.b16 %v443
    %v822 = vunpack.c.h.b16 %v443
    %v823 = vunpack.c.l.b16 %v444
    %v824 = vunpack.c.h.b16 %v444
    %v825 = vunpack.c.l.b16 %v445
    %v826 = vunpack.c.h.b16 %v445
    %v827 = vunpack.c.l.b16 %v446
    %v828 = vunpack.c.h.b16 %v446
    %v829 = vunpack.c.l.b16 %v447
    %v830 = vunpack.c.h.b16 %v447
    %v831 = vunpack.c.l.b16 %v448
    %v832 = vunpack.c.h.b16 %v448
    %v833 = vunpack.c.l.b16 %v449
    %v834 = vunpack.c.h.b16 %v449
    %v835 = vunpack.c.l.b16 %v450
    %v836 = vunpack.c.h.b16 %v450
    %v837 = vunpack.c.l.b16 %v451
    %v838 = vunpack.c.h.b16 %v451
    %v839 = vunpack.c.l.b16 %v452
    %v840 = vunpack.c.h.b16 %v452
    %v841 = vunpack.c.l.b16 %v453
    %v842 = vunpack.c.h.b16 %v453
    %v843 = vunpack.c.l.b16 %v454
    %v844 = vunpack.c.h.b16 %v454
    %v845 = vunpack.c.l.b16 %v455
    %v846 = vunpack.c.h.b16 %v455
    %v847 = vunpack.c.l.b16 %v456
    %v848 = vunpack.c.h.b16 %v456
    %v849 = vunpack.c.l.b16 %v457
    %v850 = vunpack.c.h.b16 %v457
    %v851 = vunpack.c.l.b16 %v458
    %v852 = vunpack.c.h.b16 %v458
    %v853 = vunpack.c.l.b16 %v459
    %v854 = vunpack.c.h.b16 %v459
    %v855 = vunpack.c.l.b16 %v460
    %v856 = vunpack.c.h.b16 %v460
    %v857 = vunpack.c.l.b16 %v461
    %v858 = vunpack.c.h.b16 %v461
    %v859 = vunpack.c.l.b16 %v462
    %v860 = vunpack.c.h.b16 %v462
    %v861 = vunpack.c.l.b16 %v463
    %v862 = vunpack.c.h.b16 %v463
    %v863 = vunpack.c.l.b16 %v464
    %v864 = vunpack.c.h.b16 %v464
    %v865 = vunpack.c.l.b16 %v465
    %v866 = vunpack.c.h.b16 %v465
    %v867 = vunpack.c.l.b16 %v466
    %v868 = vunpack.c.h.b16 %v466
    %v869 = vunpack.c.l.b16 %v467
    %v870 = vunpack.c.h.b16 %v467
    %v871 = vunpack.c.l.b16 %v468
    %v872 = vunpack.c.h.b16 %v468
    %v873 = vunpack.c.l.b16 %v469
    %v874 = vunpack.c.h.b16 %v469
    %v875 = vunpack.c.l.b16 %v470
    %v876 = vunpack.c.h.b16 %v470
    %v877 = vpack.c.b16 %v625, %v621
    %v878 = vpack.c.b16 %v626, %v622
    %v879 = vpack.c.b16 %v627, %v623
    %v880 = vpack.c.b16 %v628, %v624
    %v881 = vpack.c.b16 %v633, %v629
    %v882 = vpack.c.b16 %v634, %v630
    %v883 = vpack.c.b16 %v635, %v631
    %v884 = vpack.c.b16 %v636, %v632
    %v885 = vpack.c.b16 %v641, %v637
    %v886 = vpack.c.b16 %v642, %v638
    %v887 = vpack.c.b16 %v643, %v639
    %v888 = vpack.c.b16 %v644, %v640
    %v889 = vpack.c.b16 %v649, %v645
    %v890 = vpack.c.b16 %v650, %v646
    %v891 = vpack.c.b16 %v651, %v647
    %v892 = vpack.c.b16 %v652, %v648
    %v893 = vpack.c.b16 %v657, %v653
    %v894 = vpack.c.b16 %v658, %v654
    %v895 = vpack.c.b16 %v659, %v655
    %v896 = vpack.c.b16 %v660, %v656
    %v897 = vpack.c.b16 %v665, %v661
    %v898 = vpack.c.b16 %v666, %v662
    %v899 = vpack.c.b16 %v667, %v663
    %v900 = vpack.c.b16 %v668, %v664
    %v901 = vpack.c.b16 %v673, %v669
    %v902 = vpack.c.b16 %v674, %v670
    %v903 = vpack.c.b16 %v675, %v671
    %v904 = vpack.c.b16 %v676, %v672
    %v905 = vpack.c.b16 %v681, %v677
    %v906 = vpack.c.b16 %v682, %v678
    %v907 = vpack.c.b16 %v683, %v679
    %v908 = vpack.c.b16 %v684, %v680
    %v909 = vpack.c.b16 %v689, %v685
    %v910 = vpack.c.b16 %v690, %v686
    %v911 = vpack.c.b16 %v691, %v687
    %v912 = vpack.c.b16 %v692, %v688
    %v913 = vpack.c.b16 %v697, %v693
    %v914 = vpack.c.b16 %v698, %v694
    %v915 = vpack.c.b16 %v699, %v695
    %v916 = vpack.c.b16 %v700, %v696
    %v917 = vpack.c.b16 %v705, %v701
    %v918 = vpack.c.b16 %v706, %v702
    %v919 = vpack.c.b16 %v707, %v703
    %v920 = vpack.c.b16 %v708, %v704
    %v921 = vpack.c.b16 %v713, %v709
    %v922 = vpack.c.b16 %v714, %v710
    %v923 = vpack.c.b16 %v715, %v711
    %v924 = vpack.c.b16 %v716, %v712
    %v925 = vpack.c.b16 %v721, %v717
    %v926 = vpack.c.b16 %v722, %v718
    %v927 = vpack.c.b16 %v723, %v719
    %v928 = vpack.c.b16 %v724, %v720
    %v929 = vpack.c.b16 %v729, %v725
    %v930 = vpack.c.b16 %v730, %v726
    %v931 = vpack.c.b16 %v731, %v727
    %v932 = vpack.c.b16 %v732, %v728
    %v933 = vpack.c.b16 %v737, %v733
    %v934 = vpack.c.b16 %v738, %v734
    %v935 = vpack.c.b16 %v739, %v735
    %v936 = vpack.c.b16 %v740, %v736
    %v937 = vpack.c.b16 %v745, %v741
    %v938 = vpack.c.b16 %v746, %v742
    %v939 = vpack.c.b16 %v747, %v743
    %v940 = vpack.c.b16 %v748, %v744
    %v941 = vpack.c.b16 %v753, %v749
    %v942 = vpack.c.b16 %v754, %v750
    %v943 = vpack.c.b16 %v755, %v751
    %v944 = vpack.c.b16 %v756, %v752
    %v945 = vpack.c.b16 %v761, %v757
    %v946 = vpack.c.b16 %v762, %v758
    %v947 = vpack.c.b16 %v763, %v759
    %v948 = vpack.c.b16 %v764, %v760
    %v949 = vpack.c.b16 %v769, %v765
    %v950 = vpack.c.b16 %v770, %v766
    %v951 = vpack.c.b16 %v771, %v767
    %v952 = vpack.c.b16 %v772, %v768
    %v953 = vpack.c.b16 %v777, %v773
    %v954 = vpack.c.b16 %v778, %v774
    %v955 = vpack.c.b16 %v779, %v775
    %v956 = vpack.c.b16 %v780, %v776
    %v957 = vpack.c.b16 %v785, %v781
    %v958 = vpack.c.b16 %v786, %v782
    %v959 = vpack.c.b16 %v787, %v783
    %v960 = vpack.c.b16 %v788, %v784
    %v961 = vpack.c.b16 %v793, %v789
    %v962 = vpack.c.b16 %v794, %v790
    %v963 = vpack.c.b16 %v795, %v791
    %v964 = vpack.c.b16 %v796, %v792
    %v965 = vpack.c.b16 %v801, %v797
    %v966 = vpack.c.b16 %v802, %v798
    %v967 = vpack.c.b16 %v803, %v799
    %v968 = vpack.c.b16 %v804, %v800
    %v969 = vpack.c.b16 %v809, %v805
    %v970 = vpack.c.b16 %v810, %v806
    %v971 = vpack.c.b16 %v811, %v807
    %v972 = vpack.c.b16 %v812, %v808
    %v973 = vpack.c.b16 %v817, %v813
    %v974 = vpack.c.b16 %v818, %v814
    %v975 = vpack.c.b16 %v819, %v815
    %v976 = vpack.c.b16 %v820, %v816
    %v977 = vpack.c.b16 %v825, %v821
    %v978 = vpack.c.b16 %v826, %v822
    %v979 = vpack.c.b16 %v827, %v823
    %v980 = vpack.c.b16 %v828, %v824
    %v981 = vpack.c.b16 %v833, %v829
    %v982 = vpack.c.b16 %v834, %v830
    %v983 = vpack.c.b16 %v835, %v831
    %v984 = vpack.c.b16 %v836, %v832
    %v985 = vpack.c.b16 %v841, %v837
    %v986 = vpack.c.b16 %v842, %v838
    %v987 = vpack.c.b16 %v843, %v839
    %v988 = vpack.c.b16 %v844, %v840
    %v989 = vpack.c.b16 %v849, %v845
    %v990 = vpack.c.b16 %v850, %v846
    %v991 = vpack.c.b16 %v851, %v847
    %v992 = vpack.c.b16 %v852, %v848
    %v993 = vpack.c.b16 %v857, %v853
    %v994 = vpack.c.b16 %v858, %v854
    %v995 = vpack.c.b16 %v859, %v855
    %v996 = vpack.c.b16 %v860, %v856
    %v997 = vpack.c.b16 %v865, %v861
    %v998 = vpack.c.b16 %v866, %v862
    %v999 = vpack.c.b16 %v867, %v863
    %v1000 = vpack.c.b16 %v868, %v864
    %v1001 = vpack.c.b16 %v873, %v869
    %v1002 = vpack.c.b16 %v874, %v870
    %v1003 = vpack.c.b16 %v875, %v871
    %v1004 = vpack.c.b16 %v876, %v872
    %1133 = vmatprep.subr.bf16.mxu0 %v878
    %1134 = vmatpush1.bf16.msra.mxu0 %v877
    %1135 = vmatprep.subr.bf16.mxu0 %v882
    %1136 = vmatpush1.bf16.msra.mxu0 %v881
    %1137 = vmatprep.subr.bf16.mxu0 %v886
    %1138 = vmatpush1.bf16.msra.mxu0 %v885
    %1139 = vmatprep.subr.bf16.mxu0 %v890
    %1140 = vmatpush1.bf16.msra.mxu0 %v889
    %1141 = vmatprep.subr.bf16.mxu0 %v894
    %1142 = vmatpush1.bf16.msra.mxu0 %v893
    %1143 = vmatprep.subr.bf16.mxu0 %v898
    %1144 = vmatpush1.bf16.msra.mxu0 %v897
    %1145 = vmatprep.subr.bf16.mxu0 %v902
    %1146 = vmatpush1.bf16.msra.mxu0 %v901
    %1147 = vmatprep.subr.bf16.mxu0 %v906
    %1148 = vmatpush1.bf16.msra.mxu0 %v905
    %1149 = vmatprep.subr.bf16.mxu0 %v910
    %1150 = vmatpush1.bf16.msra.mxu0 %v909
    %1151 = vmatprep.subr.bf16.mxu0 %v914
    %1152 = vmatpush1.bf16.msra.mxu0 %v913
    %1153 = vmatprep.subr.bf16.mxu0 %v918
    %1154 = vmatpush1.bf16.msra.mxu0 %v917
    %1155 = vmatprep.subr.bf16.mxu0 %v922
    %1156 = vmatpush1.bf16.msra.mxu0 %v921
    %1157 = vmatprep.subr.bf16.mxu0 %v926
    %1158 = vmatpush1.bf16.msra.mxu0 %v925
    %1159 = vmatprep.subr.bf16.mxu0 %v930
    %1160 = vmatpush1.bf16.msra.mxu0 %v929
    %1161 = vmatprep.subr.bf16.mxu0 %v934
    %1162 = vmatpush1.bf16.msra.mxu0 %v933
    %1163 = vmatprep.subr.bf16.mxu0 %v938
    %1164 = vmatpush1.bf16.msra.mxu0 %v937
    %1165 = vmatprep.mubr.bf16.mxu0 %v328
    %1166 = vmatmul.mubr.bf16.gmra.mrb[0].mxu0 %v327
    %v1167 = vpop.f32.mrb[0].mxu0
    %v1168 = vadd.f32 %v476, %v1167
    %v1169 = vpop.f32.mrb[0].mxu0
    %v1170 = vadd.f32 %v480, %v1169
    %v1171 = vpop.f32.mrb[0].mxu0
    %v1172 = vadd.f32 %v476, %v1171
    %v1173 = vpop.f32.mrb[0].mxu0
    %v1174 = vadd.f32 %v480, %v1173
    %1175 = vmatprep.mubr.bf16.mxu0 %v332
    %1176 = vmatmul.mubr.bf16.gmra.mrb[0].mxu0 %v331
    %v1177 = vpop.f32.mrb[0].mxu0
    %v1178 = vadd.f32 %v476, %v1177
    %v1179 = vpop.f32.mrb[0].mxu0
    %v1180 = vadd.f32 %v480, %v1179
    %v1181 = vpop.f32.mrb[0].mxu0
    %v1182 = vadd.f32 %v476, %v1181
    %v1183 = vpop.f32.mrb[0].mxu0
    %v1184 = vadd.f32 %v480, %v1183
    %1185 = vmatprep.mubr.bf16.mxu0 %v336
    %1186 = vmatmul.mubr.bf16.gmra.mrb[0].mxu0 %v335
    %v1187 = vpop.f32.mrb[0].mxu0
    %v1188 = vadd.f32 %v476, %v1187
    %v1189 = vpop.f32.mrb[0].mxu0
    %v1190 = vadd.f32 %v480, %v1189
    %v1191 = vpop.f32.mrb[0].mxu0
    %v1192 = vadd.f32 %v476, %v1191
    %v1193 = vpop.f32.mrb[0].mxu0
    %v1194 = vadd.f32 %v480, %v1193
    %1195 = vmatprep.mubr.bf16.mxu0 %v340
    %1196 = vmatmul.mubr.bf16.gmra.mrb[0].mxu0 %v339
    %v1197 = vpop.f32.mrb[0].mxu0
    %v1198 = vadd.f32 %v476, %v1197
    %v1199 = vpop.f32.mrb[0].mxu0
    %v1200 = vadd.f32 %v480, %v1199
    %v1201 = vpop.f32.mrb[0].mxu0
    %v1202 = vadd.f32 %v476, %v1201
    %v1203 = vpop.f32.mrb[0].mxu0
    %v1204 = vadd.f32 %v480, %v1203
    %1205 = vdwg.mxu0
    %1206 = vmatprep.subr.bf16.mxu0 %v942
    %1207 = vmatpush1.bf16.msra.mxu0 %v941
    %1208 = vmatprep.subr.bf16.mxu0 %v946
    %1209 = vmatpush1.bf16.msra.mxu0 %v945
    %1210 = vmatprep.subr.bf16.mxu0 %v950
    %1211 = vmatpush1.bf16.msra.mxu0 %v949
    %1212 = vmatprep.subr.bf16.mxu0 %v954
    %1213 = vmatpush1.bf16.msra.mxu0 %v953
    %1214 = vmatprep.subr.bf16.mxu0 %v958
    %1215 = vmatpush1.bf16.msra.mxu0 %v957
    %1216 = vmatprep.subr.bf16.mxu0 %v962
    %1217 = vmatpush1.bf16.msra.mxu0 %v961
    %1218 = vmatprep.subr.bf16.mxu0 %v966
    %1219 = vmatpush1.bf16.msra.mxu0 %v965
    %1220 = vmatprep.subr.bf16.mxu0 %v970
    %1221 = vmatpush1.bf16.msra.mxu0 %v969
    %1222 = vmatprep.subr.bf16.mxu0 %v974
    %1223 = vmatpush1.bf16.msra.mxu0 %v973
    %1224 = vmatprep.subr.bf16.mxu0 %v978
    %1225 = vmatpush1.bf16.msra.mxu0 %v977
    %1226 = vmatprep.subr.bf16.mxu0 %v982
    %1227 = vmatpush1.bf16.msra.mxu0 %v981
    %1228 = vmatprep.subr.bf16.mxu0 %v986
    %1229 = vmatpush1.bf16.msra.mxu0 %v985
    %1230 = vmatprep.subr.bf16.mxu0 %v990
    %1231 = vmatpush1.bf16.msra.mxu0 %v989
    %1232 = vmatprep.subr.bf16.mxu0 %v994
    %1233 = vmatpush1.bf16.msra.mxu0 %v993
    %1234 = vmatprep.subr.bf16.mxu0 %v998
    %1235 = vmatpush1.bf16.msra.mxu0 %v997
    %1236 = vmatprep.subr.bf16.mxu0 %v1002
    %1237 = vmatpush1.bf16.msra.mxu0 %v1001
    %1238 = vmatprep.mubr.bf16.mxu0 %v330
    %1239 = vmatmul.mubr.bf16.gmra.mrb[0].mxu0 %v329
    %v1240 = vpop.f32.mrb[0].mxu0
    %v1241 = vadd.f32 %v1168, %v1240
    %v1242 = vpop.f32.mrb[0].mxu0
    %v1243 = vadd.f32 %v1170, %v1242
    %v1244 = vpop.f32.mrb[0].mxu0
    %v1245 = vadd.f32 %v1172, %v1244
    %v1246 = vpop.f32.mrb[0].mxu0
    %v1247 = vadd.f32 %v1174, %v1246
    %1248 = vmatprep.mubr.bf16.mxu0 %v334
    %1249 = vmatmul.mubr.bf16.gmra.mrb[0].mxu0 %v333
    %v1250 = vpop.f32.mrb[0].mxu0
    %v1251 = vadd.f32 %v1178, %v1250
    %v1252 = vpop.f32.mrb[0].mxu0
    %v1253 = vadd.f32 %v1180, %v1252
    %v1254 = vpop.f32.mrb[0].mxu0
    %v1255 = vadd.f32 %v1182, %v1254
    %v1256 = vpop.f32.mrb[0].mxu0
    %v1257 = vadd.f32 %v1184, %v1256
    %1258 = vmatprep.mubr.bf16.mxu0 %v338
    %1259 = vmatmul.mubr.bf16.gmra.mrb[0].mxu0 %v337
    %v1260 = vpop.f32.mrb[0].mxu0
    %v1261 = vadd.f32 %v1188, %v1260
    %v1262 = vpop.f32.mrb[0].mxu0
    %v1263 = vadd.f32 %v1190, %v1262
    %v1264 = vpop.f32.mrb[0].mxu0
    %v1265 = vadd.f32 %v1192, %v1264
    %v1266 = vpop.f32.mrb[0].mxu0
    %v1267 = vadd.f32 %v1194, %v1266
    %1268 = vmatprep.mubr.bf16.mxu0 %v342
    %1269 = vmatmul.mubr.bf16.gmra.mrb[0].mxu0 %v341
    %v1270 = vpop.f32.mrb[0].mxu0
    %v1271 = vadd.f32 %v1198, %v1270
    %v1272 = vpop.f32.mrb[0].mxu0
    %v1273 = vadd.f32 %v1200, %v1272
    %v1274 = vpop.f32.mrb[0].mxu0
    %v1275 = vadd.f32 %v1202, %v1274
    %v1276 = vpop.f32.mrb[0].mxu0
    %v1277 = vadd.f32 %v1204, %v1276
    %1278 = vdwg.mxu0
    %1279 = vmatprep.subr.bf16.mxu0 %v880
    %1280 = vmatpush1.bf16.msra.mxu0 %v879
    %1281 = vmatprep.subr.bf16.mxu0 %v884
    %1282 = vmatpush1.bf16.msra.mxu0 %v883
    %1283 = vmatprep.subr.bf16.mxu0 %v888
    %1284 = vmatpush1.bf16.msra.mxu0 %v887
    %1285 = vmatprep.subr.bf16.mxu0 %v892
    %1286 = vmatpush1.bf16.msra.mxu0 %v891
    %1287 = vmatprep.subr.bf16.mxu0 %v896
    %1288 = vmatpush1.bf16.msra.mxu0 %v895
    %1289 = vmatprep.subr.bf16.mxu0 %v900
    %1290 = vmatpush1.bf16.msra.mxu0 %v899
    %1291 = vmatprep.subr.bf16.mxu0 %v904
    %1292 = vmatpush1.bf16.msra.mxu0 %v903
    %1293 = vmatprep.subr.bf16.mxu0 %v908
    %1294 = vmatpush1.bf16.msra.mxu0 %v907
    %1295 = vmatprep.subr.bf16.mxu0 %v912
    %1296 = vmatpush1.bf16.msra.mxu0 %v911
    %1297 = vmatprep.subr.bf16.mxu0 %v916
    %1298 = vmatpush1.bf16.msra.mxu0 %v915
    %1299 = vmatprep.subr.bf16.mxu0 %v920
    %1300 = vmatpush1.bf16.msra.mxu0 %v919
    %1301 = vmatprep.subr.bf16.mxu0 %v924
    %1302 = vmatpush1.bf16.msra.mxu0 %v923
    %1303 = vmatprep.subr.bf16.mxu0 %v928
    %1304 = vmatpush1.bf16.msra.mxu0 %v927
    %1305 = vmatprep.subr.bf16.mxu0 %v932
    %1306 = vmatpush1.bf16.msra.mxu0 %v931
    %1307 = vmatprep.subr.bf16.mxu0 %v936
    %1308 = vmatpush1.bf16.msra.mxu0 %v935
    %1309 = vmatprep.subr.bf16.mxu0 %v940
    %1310 = vmatpush1.bf16.msra.mxu0 %v939
    %1311 = vmatprep.mubr.bf16.mxu0 %v328
    %1312 = vmatmul.mubr.bf16.gmra.mrb[0].mxu0 %v327
    %v1313 = vpop.f32.mrb[0].mxu0
    %v1314 = vadd.f32 %v484, %v1313
    %v1315 = vpop.f32.mrb[0].mxu0
    %v1316 = vadd.f32 %v488, %v1315
    %v1317 = vpop.f32.mrb[0].mxu0
    %v1318 = vadd.f32 %v484, %v1317
    %v1319 = vpop.f32.mrb[0].mxu0
    %v1320 = vadd.f32 %v488, %v1319
    %1321 = vmatprep.mubr.bf16.mxu0 %v332
    %1322 = vmatmul.mubr.bf16.gmra.mrb[0].mxu0 %v331
    %v1323 = vpop.f32.mrb[0].mxu0
    %v1324 = vadd.f32 %v484, %v1323
    %v1325 = vpop.f32.mrb[0].mxu0
    %v1326 = vadd.f32 %v488, %v1325
    %v1327 = vpop.f32.mrb[0].mxu0
    %v1328 = vadd.f32 %v484, %v1327
    %v1329 = vpop.f32.mrb[0].mxu0
    %v1330 = vadd.f32 %v488, %v1329
    %1331 = vmatprep.mubr.bf16.mxu0 %v336
    %1332 = vmatmul.mubr.bf16.gmra.mrb[0].mxu0 %v335
    %v1333 = vpop.f32.mrb[0].mxu0
    %v1334 = vadd.f32 %v484, %v1333
    %v1335 = vpop.f32.mrb[0].mxu0
    %v1336 = vadd.f32 %v488, %v1335
    %v1337 = vpop.f32.mrb[0].mxu0
    %v1338 = vadd.f32 %v484, %v1337
    %v1339 = vpop.f32.mrb[0].mxu0
    %v1340 = vadd.f32 %v488, %v1339
    %1341 = vmatprep.mubr.bf16.mxu0 %v340
    %1342 = vmatmul.mubr.bf16.gmra.mrb[0].mxu0 %v339
    %v1343 = vpop.f32.mrb[0].mxu0
    %v1344 = vadd.f32 %v484, %v1343
    %v1345 = vpop.f32.mrb[0].mxu0
    %v1346 = vadd.f32 %v488, %v1345
    %v1347 = vpop.f32.mrb[0].mxu0
    %v1348 = vadd.f32 %v484, %v1347
    %v1349 = vpop.f32.mrb[0].mxu0
    %v1350 = vadd.f32 %v488, %v1349
    %1351 = vdwg.mxu0
    %1352 = vmatprep.subr.bf16.mxu0 %v944
    %1353 = vmatpush1.bf16.msra.mxu0 %v943
    %1354 = vmatprep.subr.bf16.mxu0 %v948
    %1355 = vmatpush1.bf16.msra.mxu0 %v947
    %1356 = vmatprep.subr.bf16.mxu0 %v952
    %1357 = vmatpush1.bf16.msra.mxu0 %v951
    %1358 = vmatprep.subr.bf16.mxu0 %v956
    %1359 = vmatpush1.bf16.msra.mxu0 %v955
    %1360 = vmatprep.subr.bf16.mxu0 %v960
    %1361 = vmatpush1.bf16.msra.mxu0 %v959
    %1362 = vmatprep.subr.bf16.mxu0 %v964
    %1363 = vmatpush1.bf16.msra.mxu0 %v963
    %1364 = vmatprep.subr.bf16.mxu0 %v968
    %1365 = vmatpush1.bf16.msra.mxu0 %v967
    %1366 = vmatprep.subr.bf16.mxu0 %v972
    %1367 = vmatpush1.bf16.msra.mxu0 %v971
    %1368 = vmatprep.subr.bf16.mxu0 %v976
    %1369 = vmatpush1.bf16.msra.mxu0 %v975
    %1370 = vmatprep.subr.bf16.mxu0 %v980
    %1371 = vmatpush1.bf16.msra.mxu0 %v979
    %1372 = vmatprep.subr.bf16.mxu0 %v984
    %1373 = vmatpush1.bf16.msra.mxu0 %v983
    %1374 = vmatprep.subr.bf16.mxu0 %v988
    %1375 = vmatpush1.bf16.msra.mxu0 %v987
    %1376 = vmatprep.subr.bf16.mxu0 %v992
    %1377 = vmatpush1.bf16.msra.mxu0 %v991
    %1378 = vmatprep.subr.bf16.mxu0 %v996
    %1379 = vmatpush1.bf16.msra.mxu0 %v995
    %1380 = vmatprep.subr.bf16.mxu0 %v1000
    %1381 = vmatpush1.bf16.msra.mxu0 %v999
    %1382 = vmatprep.subr.bf16.mxu0 %v1004
    %1383 = vmatpush1.bf16.msra.mxu0 %v1003
    %1384 = vmatprep.mubr.bf16.mxu0 %v330
    %1385 = vmatmul.mubr.bf16.gmra.mrb[0].mxu0 %v329
    %v1386 = vpop.f32.mrb[0].mxu0
    %v1387 = vadd.f32 %v1314, %v1386
    %v1388 = vpop.f32.mrb[0].mxu0
    %v1389 = vadd.f32 %v1316, %v1388
    %v1390 = vpop.f32.mrb[0].mxu0
    %v1391 = vadd.f32 %v1318, %v1390
    %v1392 = vpop.f32.mrb[0].mxu0
    %v1393 = vadd.f32 %v1320, %v1392
    %1394 = vmatprep.mubr.bf16.mxu0 %v334
    %1395 = vmatmul.mubr.bf16.gmra.mrb[0].mxu0 %v333
    %v1396 = vpop.f32.mrb[0].mxu0
    %v1397 = vadd.f32 %v1324, %v1396
    %v1398 = vpop.f32.mrb[0].mxu0
    %v1399 = vadd.f32 %v1326, %v1398
    %v1400 = vpop.f32.mrb[0].mxu0
    %v1401 = vadd.f32 %v1328, %v1400
    %v1402 = vpop.f32.mrb[0].mxu0
    %v1403 = vadd.f32 %v1330, %v1402
    %1404 = vmatprep.mubr.bf16.mxu0 %v338
    %1405 = vmatmul.mubr.bf16.gmra.mrb[0].mxu0 %v337
    %v1406 = vpop.f32.mrb[0].mxu0
    %v1407 = vadd.f32 %v1334, %v1406
    %v1408 = vpop.f32.mrb[0].mxu0
    %v1409 = vadd.f32 %v1336, %v1408
    %v1410 = vpop.f32.mrb[0].mxu0
    %v1411 = vadd.f32 %v1338, %v1410
    %v1412 = vpop.f32.mrb[0].mxu0
    %v1413 = vadd.f32 %v1340, %v1412
    %1414 = vmatprep.mubr.bf16.mxu0 %v342
    %1415 = vmatmul.mubr.bf16.gmra.mrb[0].mxu0 %v341
    %v1416 = vpop.f32.mrb[0].mxu0
    %v1417 = vadd.f32 %v1344, %v1416
    %v1418 = vpop.f32.mrb[0].mxu0
    %v1419 = vadd.f32 %v1346, %v1418
    %v1420 = vpop.f32.mrb[0].mxu0
    %v1421 = vadd.f32 %v1348, %v1420
    %v1422 = vpop.f32.mrb[0].mxu0
    %v1423 = vadd.f32 %v1350, %v1422
    %1424 = vdwg.mxu0
    %v1425 = vmax.f32 %v1241, 0.0
    %v1426 = vmax.f32 %v1243, 0.0
    %v1427 = vmax.f32 %v1387, 0.0
    %v1428 = vmax.f32 %v1389, 0.0
    %v1429 = vmax.f32 %v1245, 0.0
    %v1430 = vmax.f32 %v1247, 0.0
    %v1431 = vmax.f32 %v1391, 0.0
    %v1432 = vmax.f32 %v1393, 0.0
    %v1433 = vmax.f32 %v1251, 0.0
    %v1434 = vmax.f32 %v1253, 0.0
    %v1435 = vmax.f32 %v1397, 0.0
    %v1436 = vmax.f32 %v1399, 0.0
    %v1437 = vmax.f32 %v1255, 0.0
    %v1438 = vmax.f32 %v1257, 0.0
    %v1439 = vmax.f32 %v1401, 0.0
    %v1440 = vmax.f32 %v1403, 0.0
    %v1441 = vmax.f32 %v1261, 0.0
    %v1442 = vmax.f32 %v1263, 0.0
    %v1443 = vmax.f32 %v1407, 0.0
    %v1444 = vmax.f32 %v1409, 0.0
    %v1445 = vmax.f32 %v1265, 0.0
    %v1446 = vmax.f32 %v1267, 0.0
    %v1447 = vmax.f32 %v1411, 0.0
    %v1448 = vmax.f32 %v1413, 0.0
    %v1449 = vmax.f32 %v1271, 0.0
    %v1450 = vmax.f32 %v1273, 0.0
    %v1451 = vmax.f32 %v1417, 0.0
    %v1452 = vmax.f32 %v1419, 0.0
    %v1453 = vmax.f32 %v1275, 0.0
    %v1454 = vmax.f32 %v1277, 0.0
    %v1455 = vmax.f32 %v1421, 0.0
    %v1456 = vmax.f32 %v1423, 0.0
    %v1457 = vpack.c.bf16 %v1429, %v1425
    %v1458 = vpack.c.bf16 %v1430, %v1426
    %v1459 = vpack.c.bf16 %v1431, %v1427
    %v1460 = vpack.c.bf16 %v1432, %v1428
    %v1461 = vpack.c.bf16 %v1437, %v1433
    %v1462 = vpack.c.bf16 %v1438, %v1434
    %v1463 = vpack.c.bf16 %v1439, %v1435
    %v1464 = vpack.c.bf16 %v1440, %v1436
    %v1465 = vpack.c.bf16 %v1445, %v1441
    %v1466 = vpack.c.bf16 %v1446, %v1442
    %v1467 = vpack.c.bf16 %v1447, %v1443
    %v1468 = vpack.c.bf16 %v1448, %v1444
    %v1469 = vpack.c.bf16 %v1453, %v1449
    %v1470 = vpack.c.bf16 %v1454, %v1450
    %v1471 = vpack.c.bf16 %v1455, %v1451
    %v1472 = vpack.c.bf16 %v1456, %v1452
    %v1473 = vld [vmem:[%s5] sm:$0xf]
    %v1474 = vld [vmem:[%s5 + $0x4] sm:$0xf]
    %v1475 = vld [vmem:[%s5 + $0x8] sm:$0xf]
    %v1476 = vld [vmem:[%s5 + $0xc] sm:$0xf]
    %v1477 = vld [vmem:[%s5 + $0x10] sm:$0xf]
    %v1478 = vld [vmem:[%s5 + $0x14] sm:$0xf]
    %v1479 = vld [vmem:[%s5 + $0x18] sm:$0xf]
    %v1480 = vld [vmem:[%s5 + $0x1c] sm:$0xf]
    %v1481 = vld [vmem:[%s5 + $0x20] sm:$0xf]
    %v1482 = vld [vmem:[%s5 + $0x24] sm:$0xf]
    %v1483 = vld [vmem:[%s5 + $0x28] sm:$0xf]
    %v1484 = vld [vmem:[%s5 + $0x2c] sm:$0xf]
    %v1485 = vld [vmem:[%s5 + $0x30] sm:$0xf]
    %v1486 = vld [vmem:[%s5 + $0x34] sm:$0xf]
    %v1487 = vld [vmem:[%s5 + $0x38] sm:$0xf]
    %v1488 = vld [vmem:[%s5 + $0x3c] sm:$0xf]
    %v1489 = vld [vmem:[%s5 + $0x40] sm:$0xf]
    %v1490 = vld [vmem:[%s5 + $0x44] sm:$0xf]
    %v1491 = vld [vmem:[%s5 + $0x48] sm:$0xf]
    %v1492 = vld [vmem:[%s5 + $0x4c] sm:$0xf]
    %v1493 = vld [vmem:[%s5 + $0x50] sm:$0xf]
    %v1494 = vld [vmem:[%s5 + $0x54] sm:$0xf]
    %v1495 = vld [vmem:[%s5 + $0x58] sm:$0xf]
    %v1496 = vld [vmem:[%s5 + $0x5c] sm:$0xf]
    %v1497 = vld [vmem:[%s5 + $0x60] sm:$0xf]
    %v1498 = vld [vmem:[%s5 + $0x64] sm:$0xf]
    %v1499 = vld [vmem:[%s5 + $0x68] sm:$0xf]
    %v1500 = vld [vmem:[%s5 + $0x6c] sm:$0xf]
    %v1501 = vld [vmem:[%s5 + $0x70] sm:$0xf]
    %v1502 = vld [vmem:[%s5 + $0x74] sm:$0xf]
    %v1503 = vld [vmem:[%s5 + $0x78] sm:$0xf]
    %v1504 = vld [vmem:[%s5 + $0x7c] sm:$0xf]
    %v1505 = vld [vmem:[%s5 + $0x80] sm:$0xf]
    %v1506 = vld [vmem:[%s5 + $0x84] sm:$0xf]
    %v1507 = vld [vmem:[%s5 + $0x88] sm:$0xf]
    %v1508 = vld [vmem:[%s5 + $0x8c] sm:$0xf]
    %v1509 = vld [vmem:[%s5 + $0x90] sm:$0xf]
    %v1510 = vld [vmem:[%s5 + $0x94] sm:$0xf]
    %v1511 = vld [vmem:[%s5 + $0x98] sm:$0xf]
    %v1512 = vld [vmem:[%s5 + $0x9c] sm:$0xf]
    %v1513 = vld [vmem:[%s5 + $0xa0] sm:$0xf]
    %v1514 = vld [vmem:[%s5 + $0xa4] sm:$0xf]
    %v1515 = vld [vmem:[%s5 + $0xa8] sm:$0xf]
    %v1516 = vld [vmem:[%s5 + $0xac] sm:$0xf]
    %v1517 = vld [vmem:[%s5 + $0xb0] sm:$0xf]
    %v1518 = vld [vmem:[%s5 + $0xb4] sm:$0xf]
    %v1519 = vld [vmem:[%s5 + $0xb8] sm:$0xf]
    %v1520 = vld [vmem:[%s5 + $0xbc] sm:$0xf]
    %v1521 = vld [vmem:[%s5 + $0xc0] sm:$0xf]
    %v1522 = vld [vmem:[%s5 + $0xc4] sm:$0xf]
    %v1523 = vld [vmem:[%s5 + $0xc8] sm:$0xf]
    %v1524 = vld [vmem:[%s5 + $0xcc] sm:$0xf]
    %v1525 = vld [vmem:[%s5 + $0xd0] sm:$0xf]
    %v1526 = vld [vmem:[%s5 + $0xd4] sm:$0xf]
    %v1527 = vld [vmem:[%s5 + $0xd8] sm:$0xf]
    %v1528 = vld [vmem:[%s5 + $0xdc] sm:$0xf]
    %v1529 = vld [vmem:[%s5 + $0xe0] sm:$0xf]
    %v1530 = vld [vmem:[%s5 + $0xe4] sm:$0xf]
    %v1531 = vld [vmem:[%s5 + $0xe8] sm:$0xf]
    %v1532 = vld [vmem:[%s5 + $0xec] sm:$0xf]
    %v1533 = vld [vmem:[%s5 + $0xf0] sm:$0xf]
    %v1534 = vld [vmem:[%s5 + $0xf4] sm:$0xf]
    %v1535 = vld [vmem:[%s5 + $0xf8] sm:$0xf]
    %v1536 = vld [vmem:[%s5 + $0xfc] sm:$0xf]
    %v1537 = vld [vmem:[%s6] sm:$0x1]
    %v1539 = vlaneseq
    %v1540 = vshrl.u32 %v1539, 7
    %v1541 = vsub.s32 0, %v1540
    %v1542 = vrot.slane %v1537, %v1541
    %v1608 = vunpack.c.l.b16 %v1473
    %v1609 = vunpack.c.l.b16 %v1474
    %v1610 = vunpack.c.l.b16 %v1475
    %v1611 = vunpack.c.l.b16 %v1476
    %v1612 = vunpack.c.l.b16 %v1477
    %v1613 = vunpack.c.l.b16 %v1478
    %v1614 = vunpack.c.l.b16 %v1479
    %v1615 = vunpack.c.l.b16 %v1480
    %v1616 = vunpack.c.l.b16 %v1481
    %v1617 = vunpack.c.l.b16 %v1482
    %v1618 = vunpack.c.l.b16 %v1483
    %v1619 = vunpack.c.l.b16 %v1484
    %v1620 = vunpack.c.l.b16 %v1485
    %v1621 = vunpack.c.l.b16 %v1486
    %v1622 = vunpack.c.l.b16 %v1487
    %v1623 = vunpack.c.l.b16 %v1488
    %v1624 = vunpack.c.l.b16 %v1489
    %v1625 = vunpack.c.l.b16 %v1490
    %v1626 = vunpack.c.l.b16 %v1491
    %v1627 = vunpack.c.l.b16 %v1492
    %v1628 = vunpack.c.l.b16 %v1493
    %v1629 = vunpack.c.l.b16 %v1494
    %v1630 = vunpack.c.l.b16 %v1495
    %v1631 = vunpack.c.l.b16 %v1496
    %v1632 = vunpack.c.l.b16 %v1497
    %v1633 = vunpack.c.l.b16 %v1498
    %v1634 = vunpack.c.l.b16 %v1499
    %v1635 = vunpack.c.l.b16 %v1500
    %v1636 = vunpack.c.l.b16 %v1501
    %v1637 = vunpack.c.l.b16 %v1502
    %v1638 = vunpack.c.l.b16 %v1503
    %v1639 = vunpack.c.l.b16 %v1504
    %v1640 = vunpack.c.l.b16 %v1505
    %v1641 = vunpack.c.l.b16 %v1506
    %v1642 = vunpack.c.l.b16 %v1507
    %v1643 = vunpack.c.l.b16 %v1508
    %v1644 = vunpack.c.l.b16 %v1509
    %v1645 = vunpack.c.l.b16 %v1510
    %v1646 = vunpack.c.l.b16 %v1511
    %v1647 = vunpack.c.l.b16 %v1512
    %v1648 = vunpack.c.l.b16 %v1513
    %v1649 = vunpack.c.l.b16 %v1514
    %v1650 = vunpack.c.l.b16 %v1515
    %v1651 = vunpack.c.l.b16 %v1516
    %v1652 = vunpack.c.l.b16 %v1517
    %v1653 = vunpack.c.l.b16 %v1518
    %v1654 = vunpack.c.l.b16 %v1519
    %v1655 = vunpack.c.l.b16 %v1520
    %v1656 = vunpack.c.l.b16 %v1521
    %v1657 = vunpack.c.l.b16 %v1522
    %v1658 = vunpack.c.l.b16 %v1523
    %v1659 = vunpack.c.l.b16 %v1524
    %v1660 = vunpack.c.l.b16 %v1525
    %v1661 = vunpack.c.l.b16 %v1526
    %v1662 = vunpack.c.l.b16 %v1527
    %v1663 = vunpack.c.l.b16 %v1528
    %v1664 = vunpack.c.l.b16 %v1529
    %v1665 = vunpack.c.l.b16 %v1530
    %v1666 = vunpack.c.l.b16 %v1531
    %v1667 = vunpack.c.l.b16 %v1532
    %v1668 = vunpack.c.l.b16 %v1533
    %v1669 = vunpack.c.l.b16 %v1534
    %v1670 = vunpack.c.l.b16 %v1535
    %v1671 = vunpack.c.l.b16 %v1536
    %v1672 = vpack.c.b16 %v1609, %v1608
    %v1673 = vpack.c.b16 %v1611, %v1610
    %v1674 = vpack.c.b16 %v1613, %v1612
    %v1675 = vpack.c.b16 %v1615, %v1614
    %v1676 = vpack.c.b16 %v1617, %v1616
    %v1677 = vpack.c.b16 %v1619, %v1618
    %v1678 = vpack.c.b16 %v1621, %v1620
    %v1679 = vpack.c.b16 %v1623, %v1622
    %v1680 = vpack.c.b16 %v1625, %v1624
    %v1681 = vpack.c.b16 %v1627, %v1626
    %v1682 = vpack.c.b16 %v1629, %v1628
    %v1683 = vpack.c.b16 %v1631, %v1630
    %v1684 = vpack.c.b16 %v1633, %v1632
    %v1685 = vpack.c.b16 %v1635, %v1634
    %v1686 = vpack.c.b16 %v1637, %v1636
    %v1687 = vpack.c.b16 %v1639, %v1638
    %v1688 = vpack.c.b16 %v1641, %v1640
    %v1689 = vpack.c.b16 %v1643, %v1642
    %v1690 = vpack.c.b16 %v1645, %v1644
    %v1691 = vpack.c.b16 %v1647, %v1646
    %v1692 = vpack.c.b16 %v1649, %v1648
    %v1693 = vpack.c.b16 %v1651, %v1650
    %v1694 = vpack.c.b16 %v1653, %v1652
    %v1695 = vpack.c.b16 %v1655, %v1654
    %v1696 = vpack.c.b16 %v1657, %v1656
    %v1697 = vpack.c.b16 %v1659, %v1658
    %v1698 = vpack.c.b16 %v1661, %v1660
    %v1699 = vpack.c.b16 %v1663, %v1662
    %v1700 = vpack.c.b16 %v1665, %v1664
    %v1701 = vpack.c.b16 %v1667, %v1666
    %v1702 = vpack.c.b16 %v1669, %v1668
    %v1703 = vpack.c.b16 %v1671, %v1670
    %1736 = vmatprep.subr.bf16.mxu0 0
    %1737 = vmatpush1.bf16.msra.mxu0 %v1672
    %1738 = vmatprep.subr.bf16.mxu0 0
    %1739 = vmatpush1.bf16.msra.mxu0 %v1673
    %1740 = vmatprep.subr.bf16.mxu0 0
    %1741 = vmatpush1.bf16.msra.mxu0 %v1674
    %1742 = vmatprep.subr.bf16.mxu0 0
    %1743 = vmatpush1.bf16.msra.mxu0 %v1675
    %1744 = vmatprep.subr.bf16.mxu0 0
    %1745 = vmatpush1.bf16.msra.mxu0 %v1676
    %1746 = vmatprep.subr.bf16.mxu0 0
    %1747 = vmatpush1.bf16.msra.mxu0 %v1677
    %1748 = vmatprep.subr.bf16.mxu0 0
    %1749 = vmatpush1.bf16.msra.mxu0 %v1678
    %1750 = vmatprep.subr.bf16.mxu0 0
    %1751 = vmatpush1.bf16.msra.mxu0 %v1679
    %1752 = vmatprep.subr.bf16.mxu0 0
    %1753 = vmatpush1.bf16.msra.mxu0 %v1680
    %1754 = vmatprep.subr.bf16.mxu0 0
    %1755 = vmatpush1.bf16.msra.mxu0 %v1681
    %1756 = vmatprep.subr.bf16.mxu0 0
    %1757 = vmatpush1.bf16.msra.mxu0 %v1682
    %1758 = vmatprep.subr.bf16.mxu0 0
    %1759 = vmatpush1.bf16.msra.mxu0 %v1683
    %1760 = vmatprep.subr.bf16.mxu0 0
    %1761 = vmatpush1.bf16.msra.mxu0 %v1684
    %1762 = vmatprep.subr.bf16.mxu0 0
    %1763 = vmatpush1.bf16.msra.mxu0 %v1685
    %1764 = vmatprep.subr.bf16.mxu0 0
    %1765 = vmatpush1.bf16.msra.mxu0 %v1686
    %1766 = vmatprep.subr.bf16.mxu0 0
    %1767 = vmatpush1.bf16.msra.mxu0 %v1687
    %1768 = vmatprep.mubr.bf16.mxu0 %v1458
    %1769 = vmatmul.mubr.bf16.gmra.mrb[0].mxu0 %v1457
    %v1770 = vpop.f32.mrb[0].mxu0
    %v1771 = vadd.f32 %v1542, %v1770
    %v1772 = vpop.f32.mrb[0].mxu0
    %v1773 = vpop.f32.mrb[0].mxu0
    %v1774 = vadd.f32 %v1542, %v1773
    %v1775 = vpop.f32.mrb[0].mxu0
    %1776 = vmatprep.mubr.bf16.mxu0 %v1462
    %1777 = vmatmul.mubr.bf16.gmra.mrb[0].mxu0 %v1461
    %v1778 = vpop.f32.mrb[0].mxu0
    %v1779 = vadd.f32 %v1542, %v1778
    %v1780 = vpop.f32.mrb[0].mxu0
    %v1781 = vpop.f32.mrb[0].mxu0
    %v1782 = vadd.f32 %v1542, %v1781
    %v1783 = vpop.f32.mrb[0].mxu0
    %1784 = vmatprep.mubr.bf16.mxu0 %v1466
    %1785 = vmatmul.mubr.bf16.gmra.mrb[0].mxu0 %v1465
    %v1786 = vpop.f32.mrb[0].mxu0
    %v1787 = vadd.f32 %v1542, %v1786
    %v1788 = vpop.f32.mrb[0].mxu0
    %v1789 = vpop.f32.mrb[0].mxu0
    %v1790 = vadd.f32 %v1542, %v1789
    %v1791 = vpop.f32.mrb[0].mxu0
    %1792 = vmatprep.mubr.bf16.mxu0 %v1470
    %1793 = vmatmul.mubr.bf16.gmra.mrb[0].mxu0 %v1469
    %v1794 = vpop.f32.mrb[0].mxu0
    %v1795 = vadd.f32 %v1542, %v1794
    %v1796 = vpop.f32.mrb[0].mxu0
    %v1797 = vpop.f32.mrb[0].mxu0
    %v1798 = vadd.f32 %v1542, %v1797
    %v1799 = vpop.f32.mrb[0].mxu0
    %1800 = vdwg.mxu0
    %1801 = vmatprep.subr.bf16.mxu0 0
    %1802 = vmatpush1.bf16.msra.mxu0 %v1688
    %1803 = vmatprep.subr.bf16.mxu0 0
    %1804 = vmatpush1.bf16.msra.mxu0 %v1689
    %1805 = vmatprep.subr.bf16.mxu0 0
    %1806 = vmatpush1.bf16.msra.mxu0 %v1690
    %1807 = vmatprep.subr.bf16.mxu0 0
    %1808 = vmatpush1.bf16.msra.mxu0 %v1691
    %1809 = vmatprep.subr.bf16.mxu0 0
    %1810 = vmatpush1.bf16.msra.mxu0 %v1692
    %1811 = vmatprep.subr.bf16.mxu0 0
    %1812 = vmatpush1.bf16.msra.mxu0 %v1693
    %1813 = vmatprep.subr.bf16.mxu0 0
    %1814 = vmatpush1.bf16.msra.mxu0 %v1694
    %1815 = vmatprep.subr.bf16.mxu0 0
    %1816 = vmatpush1.bf16.msra.mxu0 %v1695
    %1817 = vmatprep.subr.bf16.mxu0 0
    %1818 = vmatpush1.bf16.msra.mxu0 %v1696
    %1819 = vmatprep.subr.bf16.mxu0 0
    %1820 = vmatpush1.bf16.msra.mxu0 %v1697
    %1821 = vmatprep.subr.bf16.mxu0 0
    %1822 = vmatpush1.bf16.msra.mxu0 %v1698
    %1823 = vmatprep.subr.bf16.mxu0 0
    %1824 = vmatpush1.bf16.msra.mxu0 %v1699
    %1825 = vmatprep.subr.bf16.mxu0 0
    %1826 = vmatpush1.bf16.msra.mxu0 %v1700
    %1827 = vmatprep.subr.bf16.mxu0 0
    %1828 = vmatpush1.bf16.msra.mxu0 %v1701
    %1829 = vmatprep.subr.bf16.mxu0 0
    %1830 = vmatpush1.bf16.msra.mxu0 %v1702
    %1831 = vmatprep.subr.bf16.mxu0 0
    %1832 = vmatpush1.bf16.msra.mxu0 %v1703
    %1833 = vmatprep.mubr.bf16.mxu0 %v1460
    %1834 = vmatmul.mubr.bf16.gmra.mrb[0].mxu0 %v1459
    %v1835 = vpop.f32.mrb[0].mxu0
    %v1836 = vadd.f32 %v1771, %v1835
    %v1837 = vpop.f32.mrb[0].mxu0
    %v1838 = vpop.f32.mrb[0].mxu0
    %v1839 = vadd.f32 %v1774, %v1838
    %v1840 = vpop.f32.mrb[0].mxu0
    %1841 = vmatprep.mubr.bf16.mxu0 %v1464
    %1842 = vmatmul.mubr.bf16.gmra.mrb[0].mxu0 %v1463
    %v1843 = vpop.f32.mrb[0].mxu0
    %v1844 = vadd.f32 %v1779, %v1843
    %v1845 = vpop.f32.mrb[0].mxu0
    %v1846 = vpop.f32.mrb[0].mxu0
    %v1847 = vadd.f32 %v1782, %v1846
    %v1848 = vpop.f32.mrb[0].mxu0
    %1849 = vmatprep.mubr.bf16.mxu0 %v1468
    %1850 = vmatmul.mubr.bf16.gmra.mrb[0].mxu0 %v1467
    %v1851 = vpop.f32.mrb[0].mxu0
    %v1852 = vadd.f32 %v1787, %v1851
    %v1853 = vpop.f32.mrb[0].mxu0
    %v1854 = vpop.f32.mrb[0].mxu0
    %v1855 = vadd.f32 %v1790, %v1854
    %v1856 = vpop.f32.mrb[0].mxu0
    %1857 = vmatprep.mubr.bf16.mxu0 %v1472
    %1858 = vmatmul.mubr.bf16.gmra.mrb[0].mxu0 %v1471
    %v1859 = vpop.f32.mrb[0].mxu0
    %v1860 = vadd.f32 %v1795, %v1859
    %v1861 = vpop.f32.mrb[0].mxu0
    %v1862 = vpop.f32.mrb[0].mxu0
    %v1863 = vadd.f32 %v1798, %v1862
    %v1864 = vpop.f32.mrb[0].mxu0
    %1865 = vdwg.mxu0
    %v1866 = vtanh.pop %v1836
    %v1867 = vtanh.pop %v1839
    %v1868 = vtanh.pop %v1844
    %v1869 = vtanh.pop %v1847
    %v1870 = vtanh.pop %v1852
    %v1871 = vtanh.pop %v1855
    %v1872 = vtanh.pop %v1860
    %v1873 = vtanh.pop %v1863
    %v1874 = vpack.c.bf16 %v1867, %v1866
    %v1875 = vpack.c.bf16 %v1869, %v1868
    %v1876 = vpack.c.bf16 %v1871, %v1870
    %v1877 = vpack.c.bf16 %v1873, %v1872
    %v1878 = vld [vmem:[%s7] sm:$0xff]
    %v1879 = vld [vmem:[%s8] sm:$0x3]
    %v1881 = vlaneseq
    %v1882 = vshrl.u32 %v1881, 7
    %v1883 = vsub.s32 0, %v1882
    %v1884 = vrot.slane %v1879, %v1883
    %v1885 = vlaneseq
    %v1886 = vshrl.u32 %v1885, 7
    %v1887 = vsub.s32 1, %v1886
    %v1888 = vrot.slane %v1879, %v1887
    %v1892 = vunpack.c.l.b16 %v1878
    %v1893 = vunpack.c.h.b16 %v1878
    %v1894 = vpack.c.b16 %v1892, %v1892
    %v1895 = vpack.c.b16 %v1893, %v1893
    %vm1896 = vcmask 64512
    %v1898 = vsel %vm1896, %v1874, 0
    %v1901 = vsel %vm1896, %v1875, 0
    %v1904 = vsel %vm1896, %v1876, 0
    %v1907 = vsel %vm1896, %v1877, 0
    %vm1909 = vcmask 1043456
    %v1911 = vsel %vm1909, %v1894, 0
    %v1914 = vsel %vm1909, %v1895, 0
    %1916 = vmatprep.subr.bf16.mxu0 %v1914
    %1917 = vmatpush1.bf16.msra.mxu0 %v1911
    %1918 = vmatprep.subr.bf16.mxu0 0
    %1919 = vmatpush1.bf16.msra.mxu0 0
    %1920 = vmatprep.subr.bf16.mxu0 0
    %1921 = vmatpush1.bf16.msra.mxu0 0
    %1922 = vmatprep.subr.bf16.mxu0 0
    %1923 = vmatpush1.bf16.msra.mxu0 0
    %1924 = vmatprep.subr.bf16.mxu0 0
    %1925 = vmatpush1.bf16.msra.mxu0 0
    %1926 = vmatprep.subr.bf16.mxu0 0
    %1927 = vmatpush1.bf16.msra.mxu0 0
    %1928 = vmatprep.subr.bf16.mxu0 0
    %1929 = vmatpush1.bf16.msra.mxu0 0
    %1930 = vmatprep.subr.bf16.mxu0 0
    %1931 = vmatpush1.bf16.msra.mxu0 0
    %1932 = vmatprep.subr.bf16.mxu0 0
    %1933 = vmatpush1.bf16.msra.mxu0 0
    %1934 = vmatprep.subr.bf16.mxu0 0
    %1935 = vmatpush1.bf16.msra.mxu0 0
    %1936 = vmatprep.subr.bf16.mxu0 0
    %1937 = vmatpush1.bf16.msra.mxu0 0
    %1938 = vmatprep.subr.bf16.mxu0 0
    %1939 = vmatpush1.bf16.msra.mxu0 0
    %1940 = vmatprep.subr.bf16.mxu0 0
    %1941 = vmatpush1.bf16.msra.mxu0 0
    %1942 = vmatprep.subr.bf16.mxu0 0
    %1943 = vmatpush1.bf16.msra.mxu0 0
    %1944 = vmatprep.subr.bf16.mxu0 0
    %1945 = vmatpush1.bf16.msra.mxu0 0
    %1946 = vmatprep.subr.bf16.mxu0 0
    %1947 = vmatpush1.bf16.msra.mxu0 0
    %1948 = vmatprep.mubr.bf16.mxu0 0
    %1949 = vmatmul.mubr.bf16.gmra.mrb[0].mxu0 %v1898
    %v1950 = vpop.f32.mrb[0].mxu0
    %v1951 = vadd.f32 %v1884, %v1950
    %v1952 = vpop.f32.mrb[0].mxu0
    %v1953 = vadd.f32 %v1888, %v1952
    %v1954 = vpop.f32.mrb[0].mxu0
    %v1955 = vadd.f32 %v1884, %v1954
    %v1956 = vpop.f32.mrb[0].mxu0
    %v1957 = vadd.f32 %v1888, %v1956
    %1958 = vmatprep.mubr.bf16.mxu0 0
    %1959 = vmatmul.mubr.bf16.gmra.mrb[0].mxu0 %v1901
    %v1960 = vpop.f32.mrb[0].mxu0
    %v1961 = vadd.f32 %v1884, %v1960
    %v1962 = vpop.f32.mrb[0].mxu0
    %v1963 = vadd.f32 %v1888, %v1962
    %v1964 = vpop.f32.mrb[0].mxu0
    %v1965 = vadd.f32 %v1884, %v1964
    %v1966 = vpop.f32.mrb[0].mxu0
    %v1967 = vadd.f32 %v1888, %v1966
    %1968 = vmatprep.mubr.bf16.mxu0 0
    %1969 = vmatmul.mubr.bf16.gmra.mrb[0].mxu0 %v1904
    %v1970 = vpop.f32.mrb[0].mxu0
    %v1971 = vadd.f32 %v1884, %v1970
    %v1972 = vpop.f32.mrb[0].mxu0
    %v1973 = vadd.f32 %v1888, %v1972
    %v1974 = vpop.f32.mrb[0].mxu0
    %v1975 = vadd.f32 %v1884, %v1974
    %v1976 = vpop.f32.mrb[0].mxu0
    %v1977 = vadd.f32 %v1888, %v1976
    %1978 = vmatprep.mubr.bf16.mxu0 0
    %1979 = vmatmul.mubr.bf16.gmra.mrb[0].mxu0 %v1907
    %v1980 = vpop.f32.mrb[0].mxu0
    %v1981 = vadd.f32 %v1884, %v1980
    %v1982 = vpop.f32.mrb[0].mxu0
    %v1983 = vadd.f32 %v1888, %v1982
    %v1984 = vpop.f32.mrb[0].mxu0
    %v1985 = vadd.f32 %v1884, %v1984
    %v1986 = vpop.f32.mrb[0].mxu0
    %v1987 = vadd.f32 %v1888, %v1986
    %1988 = vdwg.mxu0
    %v1989 = vmax.f32 %v1951, 0.0
    %v1990 = vmax.f32 %v1953, 0.0
    %v1991 = vmax.f32 %v1955, 0.0
    %v1992 = vmax.f32 %v1957, 0.0
    %v1993 = vmax.f32 %v1961, 0.0
    %v1994 = vmax.f32 %v1963, 0.0
    %v1995 = vmax.f32 %v1965, 0.0
    %v1996 = vmax.f32 %v1967, 0.0
    %v1997 = vmax.f32 %v1971, 0.0
    %v1998 = vmax.f32 %v1973, 0.0
    %v1999 = vmax.f32 %v1975, 0.0
    %v2000 = vmax.f32 %v1977, 0.0
    %v2001 = vmax.f32 %v1981, 0.0
    %v2002 = vmax.f32 %v1983, 0.0
    %v2003 = vmax.f32 %v1985, 0.0
    %v2004 = vmax.f32 %v1987, 0.0
    %v2005 = vpack.c.bf16 %v1991, %v1989
    %v2006 = vpack.c.bf16 %v1992, %v1990
    %v2007 = vpack.c.bf16 %v1995, %v1993
    %v2008 = vpack.c.bf16 %v1996, %v1994
    %v2009 = vpack.c.bf16 %v1999, %v1997
    %v2010 = vpack.c.bf16 %v2000, %v1998
    %v2011 = vpack.c.bf16 %v2003, %v2001
    %v2012 = vpack.c.bf16 %v2004, %v2002
    %v2013 = vld [vmem:[%s9] sm:$0xf]
    %v2014 = vld [vmem:[%s9 + $0x4] sm:$0xf]
    %v2015 = vld [vmem:[%s9 + $0x8] sm:$0xf]
    %v2016 = vld [vmem:[%s9 + $0xc] sm:$0xf]
    %v2017 = vld [vmem:[%s9 + $0x10] sm:$0xf]
    %v2018 = vld [vmem:[%s9 + $0x14] sm:$0xf]
    %v2019 = vld [vmem:[%s9 + $0x18] sm:$0xf]
    %v2020 = vld [vmem:[%s9 + $0x1c] sm:$0xf]
    %v2021 = vld [vmem:[%s9 + $0x20] sm:$0xf]
    %v2022 = vld [vmem:[%s9 + $0x24] sm:$0xf]
    %v2023 = vld [vmem:[%s9 + $0x28] sm:$0xf]
    %v2024 = vld [vmem:[%s9 + $0x2c] sm:$0xf]
    %v2025 = vld [vmem:[%s9 + $0x30] sm:$0xf]
    %v2026 = vld [vmem:[%s9 + $0x34] sm:$0xf]
    %v2027 = vld [vmem:[%s9 + $0x38] sm:$0xf]
    %v2028 = vld [vmem:[%s9 + $0x3c] sm:$0xf]
    %v2029 = vld [vmem:[%s9 + $0x40] sm:$0xf]
    %v2030 = vld [vmem:[%s9 + $0x44] sm:$0xf]
    %v2031 = vld [vmem:[%s9 + $0x48] sm:$0xf]
    %v2032 = vld [vmem:[%s9 + $0x4c] sm:$0xf]
    %v2033 = vld [vmem:[%s9 + $0x50] sm:$0xf]
    %v2034 = vld [vmem:[%s9 + $0x54] sm:$0xf]
    %v2035 = vld [vmem:[%s9 + $0x58] sm:$0xf]
    %v2036 = vld [vmem:[%s9 + $0x5c] sm:$0xf]
    %v2037 = vld [vmem:[%s9 + $0x60] sm:$0xf]
    %v2038 = vld [vmem:[%s9 + $0x64] sm:$0xf]
    %v2039 = vld [vmem:[%s9 + $0x68] sm:$0xf]
    %v2040 = vld [vmem:[%s9 + $0x6c] sm:$0xf]
    %v2041 = vld [vmem:[%s9 + $0x70] sm:$0xf]
    %v2042 = vld [vmem:[%s9 + $0x74] sm:$0xf]
    %v2043 = vld [vmem:[%s9 + $0x78] sm:$0xf]
    %v2044 = vld [vmem:[%s9 + $0x7c] sm:$0xf]
    %v2045 = vld [vmem:[%s10] sm:$0x1]
    %v2047 = vlaneseq
    %v2048 = vshrl.u32 %v2047, 7
    %v2049 = vsub.s32 0, %v2048
    %v2050 = vrot.slane %v2045, %v2049
    %v2084 = vunpack.c.l.b16 %v2013
    %v2085 = vunpack.c.l.b16 %v2014
    %v2086 = vunpack.c.l.b16 %v2015
    %v2087 = vunpack.c.l.b16 %v2016
    %v2088 = vunpack.c.l.b16 %v2017
    %v2089 = vunpack.c.l.b16 %v2018
    %v2090 = vunpack.c.l.b16 %v2019
    %v2091 = vunpack.c.l.b16 %v2020
    %v2092 = vunpack.c.l.b16 %v2021
    %v2093 = vunpack.c.l.b16 %v2022
    %v2094 = vunpack.c.l.b16 %v2023
    %v2095 = vunpack.c.l.b16 %v2024
    %v2096 = vunpack.c.l.b16 %v2025
    %v2097 = vunpack.c.l.b16 %v2026
    %v2098 = vunpack.c.l.b16 %v2027
    %v2099 = vunpack.c.l.b16 %v2028
    %v2100 = vunpack.c.l.b16 %v2029
    %v2101 = vunpack.c.l.b16 %v2030
    %v2102 = vunpack.c.l.b16 %v2031
    %v2103 = vunpack.c.l.b16 %v2032
    %v2104 = vunpack.c.l.b16 %v2033
    %v2105 = vunpack.c.l.b16 %v2034
    %v2106 = vunpack.c.l.b16 %v2035
    %v2107 = vunpack.c.l.b16 %v2036
    %v2108 = vunpack.c.l.b16 %v2037
    %v2109 = vunpack.c.l.b16 %v2038
    %v2110 = vunpack.c.l.b16 %v2039
    %v2111 = vunpack.c.l.b16 %v2040
    %v2112 = vunpack.c.l.b16 %v2041
    %v2113 = vunpack.c.l.b16 %v2042
    %v2114 = vunpack.c.l.b16 %v2043
    %v2115 = vunpack.c.l.b16 %v2044
    %v2116 = vpack.c.b16 %v2085, %v2084
    %v2117 = vpack.c.b16 %v2087, %v2086
    %v2118 = vpack.c.b16 %v2089, %v2088
    %v2119 = vpack.c.b16 %v2091, %v2090
    %v2120 = vpack.c.b16 %v2093, %v2092
    %v2121 = vpack.c.b16 %v2095, %v2094
    %v2122 = vpack.c.b16 %v2097, %v2096
    %v2123 = vpack.c.b16 %v2099, %v2098
    %v2124 = vpack.c.b16 %v2101, %v2100
    %v2125 = vpack.c.b16 %v2103, %v2102
    %v2126 = vpack.c.b16 %v2105, %v2104
    %v2127 = vpack.c.b16 %v2107, %v2106
    %v2128 = vpack.c.b16 %v2109, %v2108
    %v2129 = vpack.c.b16 %v2111, %v2110
    %v2130 = vpack.c.b16 %v2113, %v2112
    %v2131 = vpack.c.b16 %v2115, %v2114
    %2148 = vmatprep.subr.bf16.mxu0 0
    %2149 = vmatpush1.bf16.msra.mxu0 %v2116
    %2150 = vmatprep.subr.bf16.mxu0 0
    %2151 = vmatpush1.bf16.msra.mxu0 %v2117
    %2152 = vmatprep.subr.bf16.mxu0 0
    %2153 = vmatpush1.bf16.msra.mxu0 %v2118
    %2154 = vmatprep.subr.bf16.mxu0 0
    %2155 = vmatpush1.bf16.msra.mxu0 %v2119
    %2156 = vmatprep.subr.bf16.mxu0 0
    %2157 = vmatpush1.bf16.msra.mxu0 %v2120
    %2158 = vmatprep.subr.bf16.mxu0 0
    %2159 = vmatpush1.bf16.msra.mxu0 %v2121
    %2160 = vmatprep.subr.bf16.mxu0 0
    %2161 = vmatpush1.bf16.msra.mxu0 %v2122
    %2162 = vmatprep.subr.bf16.mxu0 0
    %2163 = vmatpush1.bf16.msra.mxu0 %v2123
    %2164 = vmatprep.subr.bf16.mxu0 0
    %2165 = vmatpush1.bf16.msra.mxu0 %v2124
    %2166 = vmatprep.subr.bf16.mxu0 0
    %2167 = vmatpush1.bf16.msra.mxu0 %v2125
    %2168 = vmatprep.subr.bf16.mxu0 0
    %2169 = vmatpush1.bf16.msra.mxu0 %v2126
    %2170 = vmatprep.subr.bf16.mxu0 0
    %2171 = vmatpush1.bf16.msra.mxu0 %v2127
    %2172 = vmatprep.subr.bf16.mxu0 0
    %2173 = vmatpush1.bf16.msra.mxu0 %v2128
    %2174 = vmatprep.subr.bf16.mxu0 0
    %2175 = vmatpush1.bf16.msra.mxu0 %v2129
    %2176 = vmatprep.subr.bf16.mxu0 0
    %2177 = vmatpush1.bf16.msra.mxu0 %v2130
    %2178 = vmatprep.subr.bf16.mxu0 0
    %2179 = vmatpush1.bf16.msra.mxu0 %v2131
    %2180 = vmatprep.mubr.bf16.mxu0 %v2006
    %2181 = vmatmul.mubr.bf16.gmra.mrb[0].mxu0 %v2005
    %v2182 = vpop.f32.mrb[0].mxu0
    %v2183 = vadd.f32 %v2050, %v2182
    %v2184 = vpop.f32.mrb[0].mxu0
    %v2185 = vpop.f32.mrb[0].mxu0
    %v2186 = vadd.f32 %v2050, %v2185
    %v2187 = vpop.f32.mrb[0].mxu0
    %2188 = vmatprep.mubr.bf16.mxu0 %v2008
    %2189 = vmatmul.mubr.bf16.gmra.mrb[0].mxu0 %v2007
    %v2190 = vpop.f32.mrb[0].mxu0
    %v2191 = vadd.f32 %v2050, %v2190
    %v2192 = vpop.f32.mrb[0].mxu0
    %v2193 = vpop.f32.mrb[0].mxu0
    %v2194 = vadd.f32 %v2050, %v2193
    %v2195 = vpop.f32.mrb[0].mxu0
    %2196 = vmatprep.mubr.bf16.mxu0 %v2010
    %2197 = vmatmul.mubr.bf16.gmra.mrb[0].mxu0 %v2009
    %v2198 = vpop.f32.mrb[0].mxu0
    %v2199 = vadd.f32 %v2050, %v2198
    %v2200 = vpop.f32.mrb[0].mxu0
    %v2201 = vpop.f32.mrb[0].mxu0
    %v2202 = vadd.f32 %v2050, %v2201
    %v2203 = vpop.f32.mrb[0].mxu0
    %2204 = vmatprep.mubr.bf16.mxu0 %v2012
    %2205 = vmatmul.mubr.bf16.gmra.mrb[0].mxu0 %v2011
    %v2206 = vpop.f32.mrb[0].mxu0
    %v2207 = vadd.f32 %v2050, %v2206
    %v2208 = vpop.f32.mrb[0].mxu0
    %v2209 = vpop.f32.mrb[0].mxu0
    %v2210 = vadd.f32 %v2050, %v2209
    %v2211 = vpop.f32.mrb[0].mxu0
    %2212 = vdwg.mxu0
    %v2213 = vtanh.pop %v2183
    %v2214 = vtanh.pop %v2186
    %v2215 = vtanh.pop %v2191
    %v2216 = vtanh.pop %v2194
    %v2217 = vtanh.pop %v2199
    %v2218 = vtanh.pop %v2202
    %v2219 = vtanh.pop %v2207
    %v2220 = vtanh.pop %v2210
    %2221 = vst [vmem:[#allocation5] sm:$0xff] %v2213
    %2222 = vst [vmem:[#allocation5 + $0x8] sm:$0xff] %v2214
    %2223 = vst [vmem:[#allocation5 + $0x10] sm:$0xff] %v2215
    %2224 = vst [vmem:[#allocation5 + $0x18] sm:$0xff] %v2216
    %2225 = vst [vmem:[#allocation5 + $0x20] sm:$0xff] %v2217
    %2226 = vst [vmem:[#allocation5 + $0x28] sm:$0xff] %v2218
    %2227 = vst [vmem:[#allocation5 + $0x30] sm:$0xff] %v2219
    %2228 = vst [vmem:[#allocation5 + $0x38] sm:$0xff] %v2220
    // Predicated region
    $region50: #{tpu_custom_call.1} parent=1 // pred_check
      _
    $region51: #{tpu_custom_call.1} parent=1 // pred_check_branch
      %2230 = sbr.rel (0) target = $region53
    $region52: #{tpu_custom_call.1} parent=1 // pred_region
      %s2232 = ssub.s32 1024, 1024
      %2233 = vsyncadd [#allocation4], %s2232
      %s2234 = sshll.u32 [#allocation5], 4
      %s2235 = int_to_ptr.vmem [resolvable:$true] %s2234
      %2240 = dma.vmem_to_hbm [thread:$0]  %s2235, 1024, %s11, [#allocation4], 128, 128, 8
    $region53: #{tpu_custom_call.1} parent=1 // pred_fallthru
      _
    // Predicated region
    $region54: #{tpu_custom_call.1} parent=1 // pred_check
      _
    $region55: #{tpu_custom_call.1} parent=1 // pred_check_branch
      %2242 = sbr.rel (0) target = $region57
    $region56: #{tpu_custom_call.1} parent=1 // pred_region
      %2243 = dma.done [#allocation4], 1024
    $region57: #{tpu_custom_call.1} parent=1 // pred_fallthru
      _
    %2244 = vsyncpa [#allocation3], 1
    %2245 = vsyncpa [#allocation4], 1

</llo_original>
